<compile_context>
chip_gen: v5e
topology: v5e:2x2
jax: 0.10.0
libtpu: 0.0.40
codegen_flags: <defaults>
</compile_context>

<pallas_src>
import functools

import jax
import jax.numpy as jnp
from jax import lax
from jax.experimental import pallas as pl
from jax.experimental.pallas import tpu as pltpu

# ---------------- config (small synthetic shapes, lane-dense) ----------------
B, C, H, W = 2, 4, 16, 16
HW = H * W
FEATURE_DIM = 128          # stand-in for resnet50 num_features (2048)
PROJECTION_DIM = 128       # matches module default projection_dim=128
QUEUE_SIZE = 128           # toy stand-in for 65536; QUEUE_SIZE % B == 0 (MoCo invariant)
TEMPERATURE = 0.07
MOMENTUM = 0.999
LOGITS_DIM = 1 + QUEUE_SIZE
LOGITS_PAD = ((LOGITS_DIM + 127) // 128) * 128   # lane-dense padded logits store

_PARAM_ORDER = ("enc_w", "enc_b", "proj_w1", "proj_b1", "proj_w2", "proj_b2")

_VMEM = pl.BlockSpec(memory_space=pltpu.MemorySpace.VMEM)
_SMEM = pl.BlockSpec(memory_space=pltpu.MemorySpace.SMEM)


# ---------------- shared traced helpers ----------------
def _encode_project(pooled, enc_w, enc_b, w1, b1, w2, b2):
    """GAP-features -> Linear -> [Linear, ReLU, Linear] -> L2 normalize."""
    feat = jnp.dot(pooled, enc_w, preferred_element_type=jnp.float32) + enc_b
    h = jnp.maximum(jnp.dot(feat, w1, preferred_element_type=jnp.float32) + b1, 0.0)
    p = jnp.dot(h, w2, preferred_element_type=jnp.float32) + b2
    # F.normalize(dim=1, eps=1e-12)  ==  p * rsqrt(max(||p||^2, eps^2))
    inv_norm = lax.rsqrt(jnp.maximum(jnp.sum(p * p, axis=-1, keepdims=True), 1e-24))
    return feat, p * inv_norm


# ---------------- kernels ----------------
def _query_only_kernel(x_ref, enc_w_ref, enc_b_ref, w1_ref, b1_ref, w2_ref, b2_ref,
                       qfeat_ref, qproj_ref):
    pooled = jnp.mean(x_ref[...], axis=-1)          # global average pool [B, C]
    feat, proj = _encode_project(pooled, enc_w_ref[...], enc_b_ref[...],
                                 w1_ref[...], b1_ref[...], w2_ref[...], b2_ref[...])
    qfeat_ref[...] = feat.astype(qfeat_ref.dtype)
    qproj_ref[...] = proj.astype(qproj_ref.dtype)


def _moco_fwd_kernel(
    # ---- inputs ----
    ptr_ref,                                   # SMEM (1,) int32  queue pointer
    x_ref,                                     # [B, C, HW]
    perm_ref, perm_inv_ref,                    # [B, B] one-hot shuffle / unshuffle
    q_enc_w_ref, q_enc_b_ref, q_w1_ref, q_b1_ref, q_w2_ref, q_b2_ref,
    k_enc_w_ref, k_enc_b_ref, k_w1_ref, k_b1_ref, k_w2_ref, k_b2_ref,
    queue_ref,                                 # [K, P]
    # ---- outputs ----
    qfeat_ref, qproj_ref, kproj_ref, logits_ref,
    nk_enc_w_ref, nk_enc_b_ref, nk_w1_ref, nk_b1_ref, nk_w2_ref, nk_b2_ref,
    nqueue_ref,
    *, m, inv_temp, batch, queue_size, logits_pad):
    # ----- shared global average pool (parameter-free, so shared by q/k) -----
    pooled = jnp.mean(x_ref[...], axis=-1)                       # [B, C]

    # ----- query branch -----
    qfeat, qproj = _encode_project(pooled, q_enc_w_ref[...], q_enc_b_ref[...],
                                   q_w1_ref[...], q_b1_ref[...],
                                   q_w2_ref[...], q_b2_ref[...])
    qfeat_ref[...] = qfeat.astype(qfeat_ref.dtype)
    qproj_ref[...] = qproj.astype(qproj_ref.dtype)

    # ----- momentum (EMA) update of key params, written in place (aliased) -----
    def _ema(k_ref, q_ref, out_ref):
        new = m * k_ref[...] + (1.0 - m) * q_ref[...]
        out_ref[...] = new.astype(out_ref.dtype)
        return new

    k_enc_w = _ema(k_enc_w_ref, q_enc_w_ref, nk_enc_w_ref)
    k_enc_b = _ema(k_enc_b_ref, q_enc_b_ref, nk_enc_b_ref)
    k_w1 = _ema(k_w1_ref, q_w1_ref, nk_w1_ref)
    k_b1 = _ema(k_b1_ref, q_b1_ref, nk_b1_ref)
    k_w2 = _ema(k_w2_ref, q_w2_ref, nk_w2_ref)
    k_b2 = _ema(k_b2_ref, q_b2_ref, nk_b2_ref)

    # ----- key branch with batch shuffle / unshuffle (one-hot permutation) -----
    pooled_s = jnp.dot(perm_ref[...], pooled, preferred_element_type=jnp.float32)
    _, kproj_s = _encode_project(pooled_s, k_enc_w, k_enc_b, k_w1, k_b1, k_w2, k_b2)
    kproj = jnp.dot(perm_inv_ref[...], kproj_s, preferred_element_type=jnp.float32)
    kproj_ref[...] = kproj.astype(kproj_ref.dtype)

    # ----- contrastive logits: single lane-dense store [B, logits_pad] -----
    queue_old = queue_ref[...]                                   # read BEFORE enqueue
    l_pos = jnp.sum(qproj * kproj, axis=-1, keepdims=True)       # [B, 1]
    l_neg = lax.dot_general(qproj, queue_old, (((1,), (1,)), ((), ())),
                            preferred_element_type=jnp.float32)  # [B, K]
    pieces = [l_pos, l_neg]
    pad_w = logits_pad - 1 - queue_size
    if pad_w > 0:
        pieces.append(jnp.zeros((batch, pad_w), jnp.float32))
    logits_ref[...] = (jnp.concatenate(pieces, axis=-1) * inv_temp).astype(logits_ref.dtype)

    # ----- dequeue/enqueue: write keys at rows [ptr, ptr+B) (no wrap since K % B == 0) -----
    ptr = ptr_ref[0]
    row_b = lax.broadcasted_iota(jnp.int32, (queue_size, batch), 0)
    col_b = lax.broadcasted_iota(jnp.int32, (queue_size, batch), 1)
    scatter_mat = (row_b == col_b + ptr).astype(jnp.float32)     # [K, B] one-hot rows
    scattered = jnp.dot(scatter_mat, kproj, preferred_element_type=jnp.float32)
    row_p = lax.broadcasted_iota(jnp.int32, (queue_size, queue_old.shape[-1]), 0)
    in_window = (row_p >= ptr) & (row_p < ptr + batch)
    nqueue_ref[...] = jnp.where(in_window, scattered, queue_old).astype(nqueue_ref.dtype)


# ---------------- parameter construction (deterministic) ----------------
def init_params(key):
    ks = jax.random.split(key, 8)
    scale = 0.02
    q = {
        "enc_w": scale * jax.random.normal(ks[0], (C, FEATURE_DIM), jnp.float32),
        "enc_b": scale * jax.random.normal(ks[1], (1, FEATURE_DIM), jnp.float32),
        "proj_w1": scale * jax.random.normal(ks[2], (FEATURE_DIM, FEATURE_DIM), jnp.float32),
        "proj_b1": scale * jax.random.normal(ks[3], (1, FEATURE_DIM), jnp.float32),
        "proj_w2": scale * jax.random.normal(ks[4], (FEATURE_DIM, PROJECTION_DIM), jnp.float32),
        "proj_b2": scale * jax.random.normal(ks[5], (1, PROJECTION_DIM), jnp.float32),
    }
    # key encoder initialized as a copy of the query encoder (as in __init__)
    k = {name: jnp.array(v) for name, v in q.items()}
    queue = jax.random.normal(ks[6], (QUEUE_SIZE, PROJECTION_DIM), jnp.float32)
    queue = queue / jnp.maximum(
        jnp.sqrt(jnp.sum(queue * queue, axis=1, keepdims=True)), 1e-12)
    queue_ptr = jnp.zeros((1,), jnp.int32)
    return q, k, queue, queue_ptr


# ---------------- forward pass ----------------
def forward(x, params_q, params_k, queue, queue_ptr, rng, compute_key=True):
    b = x.shape[0]
    x3 = x.reshape(b, x.shape[1], x.shape[2] * x.shape[3])
    q_list = [params_q[n] for n in _PARAM_ORDER]

    if not compute_key:
        qfeat, qproj = pl.pallas_call(
            _query_only_kernel,
            out_shape=(jax.ShapeDtypeStruct((b, FEATURE_DIM), jnp.float32),
                       jax.ShapeDtypeStruct((b, PROJECTION_DIM), jnp.float32)),
            in_specs=[_VMEM] * 7,
            out_specs=(_VMEM, _VMEM),
        )(x3, *q_list)
        return qfeat, qproj, None, None, params_k, queue, queue_ptr

    k_list = [params_k[n] for n in _PARAM_ORDER]

    # batch shuffle / unshuffle as tiny one-hot permutation matrices (glue)
    idx_shuffle = jax.random.permutation(rng, b)
    idx_unshuffle = jnp.argsort(idx_shuffle)
    perm = jax.nn.one_hot(idx_shuffle, b, dtype=jnp.float32)
    perm_inv = jax.nn.one_hot(idx_unshuffle, b, dtype=jnp.float32)

    ptr_arr = queue_ptr.astype(jnp.int32)                        # (1,) int32 -> SMEM

    out_shapes = (
        jax.ShapeDtypeStruct((b, FEATURE_DIM), jnp.float32),     # query_features
        jax.ShapeDtypeStruct((b, PROJECTION_DIM), jnp.float32),  # query_proj
        jax.ShapeDtypeStruct((b, PROJECTION_DIM), jnp.float32),  # key_proj
        jax.ShapeDtypeStruct((b, LOGITS_PAD), jnp.float32),      # padded logits
    ) + tuple(jax.ShapeDtypeStruct(p.shape, p.dtype) for p in k_list) + (
        jax.ShapeDtypeStruct(queue.shape, queue.dtype),          # updated queue
    )

    # inputs: 0 ptr, 1 x, 2 perm, 3 perm_inv, 4..9 q params, 10..15 k params, 16 queue
    io_aliases = {10 + i: 4 + i for i in range(6)}               # k params updated in place
    io_aliases[16] = 10                                          # queue updated in place

    outs = pl.pallas_call(
        functools.partial(_moco_fwd_kernel, m=MOMENTUM, inv_temp=1.0 / TEMPERATURE,
                          batch=b, queue_size=queue.shape[0], logits_pad=LOGITS_PAD),
        out_shape=out_shapes,
        in_specs=[_SMEM] + [_VMEM] * 16,
        out_specs=tuple([_VMEM] * len(out_shapes)),
        input_output_aliases=io_aliases,
    )(ptr_arr, x3, perm, perm_inv, *q_list, *k_list, queue)

    qfeat, qproj, kproj, logits_padded = outs[0], outs[1], outs[2], outs[3]
    new_params_k = {n: lax.stop_gradient(p) for n, p in zip(_PARAM_ORDER, outs[4:10])}
    new_queue = lax.stop_gradient(outs[10])

    logits = logits_padded[:, :LOGITS_DIM]
    labels = jnp.zeros((b,), jnp.int32)
    new_ptr = (queue_ptr + b) % queue.shape[0]
    return qfeat, qproj, logits, labels, new_params_k, new_queue, new_ptr


# ---------------- pure-JAX reference (for correctness check) ----------------
def _ref_forward(x, pq, pk, queue, ptr, idx_shuffle):
    pooled = x.reshape(x.shape[0], x.shape[1], -1).mean(-1)

    def enc_proj(p, inp):
        f = inp @ p["enc_w"] + p["enc_b"]
        h = jnp.maximum(f @ p["proj_w1"] + p["proj_b1"], 0.0)
        pr = h @ p["proj_w2"] + p["proj_b2"]
        return f, pr / jnp.maximum(jnp.sqrt(jnp.sum(pr * pr, 1, keepdims=True)), 1e-12)

    qf, qp = enc_proj(pq, pooled)
    pk_new = {n: MOMENTUM * pk[n] + (1.0 - MOMENTUM) * pq[n] for n in pq}
    _, kp_s = enc_proj(pk_new, pooled[idx_shuffle])
    kp = kp_s[jnp.argsort(idx_shuffle)]
    l_pos = jnp.sum(qp * kp, 1, keepdims=True)
    l_neg = qp @ queue.T
    logits = jnp.concatenate([l_pos, l_neg], 1) / TEMPERATURE
    new_queue = lax.dynamic_update_slice(queue, kp, (ptr, 0))
    return qf, qp, logits, pk_new, new_queue


# ---------------- main ----------------
if __name__ == "__main__":
    root = jax.random.PRNGKey(0)
    k_params, k_input, k_shuffle = jax.random.split(root, 3)

    params_q, params_k, queue, queue_ptr = init_params(k_params)
    x = jax.random.normal(k_input, (B, C, H, W), jnp.float32)

    fwd = jax.jit(forward, static_argnames=("compute_key",))
    (query_features, query_proj, logits, labels,
     new_params_k, new_queue, new_ptr) = fwd(
        x, params_q, params_k, queue, queue_ptr, k_shuffle, compute_key=True)

    jax.block_until_ready((query_features, query_proj, logits, labels,
                           new_params_k, new_queue, new_ptr))

    # shape checks
    assert query_features.shape == (B, FEATURE_DIM)
    assert query_proj.shape == (B, PROJECTION_DIM)
    assert logits.shape == (B, 1 + QUEUE_SIZE)
    assert labels.shape == (B,)
    assert new_queue.shape == queue.shape
    assert int(new_ptr[0]) == (0 + B) % QUEUE_SIZE
    # projections are unit-norm
    assert bool(jnp.allclose(jnp.sum(query_proj * query_proj, axis=1), 1.0, atol=1e-4))

    # numerical check against a pure-JAX reference
    idx_shuffle = jax.random.permutation(k_shuffle, B)
    r_qf, r_qp, r_logits, r_pk, r_queue = _ref_forward(
        x, params_q, params_k, queue, int(queue_ptr[0]), idx_shuffle)
    assert bool(jnp.allclose(query_features, r_qf, atol=1e-3, rtol=1e-3))
    assert bool(jnp.allclose(query_proj, r_qp, atol=1e-3, rtol=1e-3))
    assert bool(jnp.allclose(logits, r_logits, atol=1e-3, rtol=1e-3))
    assert bool(jnp.allclose(new_queue, r_queue, atol=1e-3, rtol=1e-3))
    assert bool(jnp.allclose(new_params_k["proj_w1"], r_pk["proj_w1"], atol=1e-6))

    print("KERNEL_OK")
</pallas_src>

<mosaic_0001>
module attributes {stable_mosaic.version = 11 : i64} {
  func.func @_moco_fwd_kernel(%arg0: memref<1xi32, #tpu.memory_space<smem>>, %arg1: memref<2x4x256xf32, #tpu.memory_space<vmem>>, %arg2: memref<2x2xf32, #tpu.memory_space<vmem>>, %arg3: memref<2x2xf32, #tpu.memory_space<vmem>>, %arg4: memref<4x128xf32, #tpu.memory_space<vmem>>, %arg5: memref<1x128xf32, #tpu.memory_space<vmem>>, %arg6: memref<128x128xf32, #tpu.memory_space<vmem>>, %arg7: memref<1x128xf32, #tpu.memory_space<vmem>>, %arg8: memref<128x128xf32, #tpu.memory_space<vmem>>, %arg9: memref<1x128xf32, #tpu.memory_space<vmem>>, %arg10: memref<4x128xf32, #tpu.memory_space<vmem>>, %arg11: memref<1x128xf32, #tpu.memory_space<vmem>>, %arg12: memref<128x128xf32, #tpu.memory_space<vmem>>, %arg13: memref<1x128xf32, #tpu.memory_space<vmem>>, %arg14: memref<128x128xf32, #tpu.memory_space<vmem>>, %arg15: memref<1x128xf32, #tpu.memory_space<vmem>>, %arg16: memref<128x128xf32, #tpu.memory_space<vmem>>, %arg17: memref<2x128xf32, #tpu.memory_space<vmem>>, %arg18: memref<2x128xf32, #tpu.memory_space<vmem>>, %arg19: memref<2x128xf32, #tpu.memory_space<vmem>>, %arg20: memref<2x256xf32, #tpu.memory_space<vmem>>, %arg21: memref<4x128xf32, #tpu.memory_space<vmem>>, %arg22: memref<1x128xf32, #tpu.memory_space<vmem>>, %arg23: memref<128x128xf32, #tpu.memory_space<vmem>>, %arg24: memref<1x128xf32, #tpu.memory_space<vmem>>, %arg25: memref<128x128xf32, #tpu.memory_space<vmem>>, %arg26: memref<1x128xf32, #tpu.memory_space<vmem>>, %arg27: memref<128x128xf32, #tpu.memory_space<vmem>>) attributes {dimension_semantics = [], scalar_prefetch = 0 : i64, scratch_operands = 0 : i64, tpu.core_type = #tpu.core_type<tc>} {
    %c0 = arith.constant 0 : index
    %c0_0 = arith.constant 0 : index
    %c0_1 = arith.constant 0 : index
    %0 = vector.load %arg1[%c0, %c0_0, %c0_1] : memref<2x4x256xf32, #tpu.memory_space<vmem>>, vector<2x4x256xf32>
    %cst = arith.constant dense<0.000000e+00> : vector<2x4xf32>
    %1 = vector.multi_reduction <add>, %0, %cst [2] : vector<2x4x256xf32> to vector<2x4xf32>
    %cst_2 = arith.constant 2.560000e+02 : f32
    %2 = vector.broadcast %cst_2 : f32 to vector<2x4xf32>
    %3 = arith.divf %1, %2 : vector<2x4xf32>
    %c0_3 = arith.constant 0 : index
    %c0_4 = arith.constant 0 : index
    %4 = vector.load %arg4[%c0_3, %c0_4] : memref<4x128xf32, #tpu.memory_space<vmem>>, vector<4x128xf32>
    %c0_5 = arith.constant 0 : index
    %c0_6 = arith.constant 0 : index
    %5 = vector.load %arg5[%c0_5, %c0_6] : memref<1x128xf32, #tpu.memory_space<vmem>>, vector<1x128xf32>
    %c0_7 = arith.constant 0 : index
    %c0_8 = arith.constant 0 : index
    %6 = vector.load %arg6[%c0_7, %c0_8] : memref<128x128xf32, #tpu.memory_space<vmem>>, vector<128x128xf32>
    %c0_9 = arith.constant 0 : index
    %c0_10 = arith.constant 0 : index
    %7 = vector.load %arg7[%c0_9, %c0_10] : memref<1x128xf32, #tpu.memory_space<vmem>>, vector<1x128xf32>
    %c0_11 = arith.constant 0 : index
    %c0_12 = arith.constant 0 : index
    %8 = vector.load %arg8[%c0_11, %c0_12] : memref<128x128xf32, #tpu.memory_space<vmem>>, vector<128x128xf32>
    %c0_13 = arith.constant 0 : index
    %c0_14 = arith.constant 0 : index
    %9 = vector.load %arg9[%c0_13, %c0_14] : memref<1x128xf32, #tpu.memory_space<vmem>>, vector<1x128xf32>
    %cst_15 = arith.constant dense<0.000000e+00> : vector<2x128xf32>
    %10 = tpu.matmul %3, %4, %cst_15 {dimension_numbers = #tpu.dot_dimension_numbers<[1], [0], [0], [1], [0, 0, 1, 1], [], []>} : vector<2x4xf32>, vector<4x128xf32>, vector<2x128xf32> -> vector<2x128xf32>
    %11 = vector.broadcast %5 : vector<1x128xf32> to vector<2x128xf32>
    %12 = arith.addf %10, %11 : vector<2x128xf32>
    %cst_16 = arith.constant dense<0.000000e+00> : vector<2x128xf32>
    %13 = tpu.matmul %12, %6, %cst_16 {dimension_numbers = #tpu.dot_dimension_numbers<[1], [0], [0], [1], [0, 0, 1, 1], [], []>} : vector<2x128xf32>, vector<128x128xf32>, vector<2x128xf32> -> vector<2x128xf32>
    %14 = vector.broadcast %7 : vector<1x128xf32> to vector<2x128xf32>
    %15 = arith.addf %13, %14 : vector<2x128xf32>
    %cst_17 = arith.constant 0.000000e+00 : f32
    %16 = vector.broadcast %cst_17 : f32 to vector<2x128xf32>
    %17 = arith.maximumf %15, %16 : vector<2x128xf32>
    %cst_18 = arith.constant dense<0.000000e+00> : vector<2x128xf32>
    %18 = tpu.matmul %17, %8, %cst_18 {dimension_numbers = #tpu.dot_dimension_numbers<[1], [0], [0], [1], [0, 0, 1, 1], [], []>} : vector<2x128xf32>, vector<128x128xf32>, vector<2x128xf32> -> vector<2x128xf32>
    %19 = vector.broadcast %9 : vector<1x128xf32> to vector<2x128xf32>
    %20 = arith.addf %18, %19 : vector<2x128xf32>
    %21 = arith.mulf %20, %20 : vector<2x128xf32>
    %cst_19 = arith.constant dense<0.000000e+00> : vector<2xf32>
    %22 = vector.multi_reduction <add>, %21, %cst_19 [1] : vector<2x128xf32> to vector<2xf32>
    %23 = vector.shape_cast %22 : vector<2xf32> to vector<2x1xf32>
    %cst_20 = arith.constant 1.000000e-24 : f32
    %24 = vector.broadcast %cst_20 : f32 to vector<2x1xf32>
    %25 = arith.maximumf %23, %24 : vector<2x1xf32>
    %26 = math.rsqrt %25 : vector<2x1xf32>
    %27 = vector.broadcast %26 : vector<2x1xf32> to vector<2x128xf32>
    %28 = arith.mulf %20, %27 : vector<2x128xf32>
    %c0_21 = arith.constant 0 : index
    %c0_22 = arith.constant 0 : index
    %29 = vector.load %arg17[%c0_21, %c0_22] : memref<2x128xf32, #tpu.memory_space<vmem>>, vector<2x128xf32>
    tpu.vector_store %arg17[%c0_21, %c0_22], %12 {strides = array<i32>} : memref<2x128xf32, #tpu.memory_space<vmem>>, vector<2x128xf32>,
    %c0_23 = arith.constant 0 : index
    %c0_24 = arith.constant 0 : index
    %30 = vector.load %arg18[%c0_23, %c0_24] : memref<2x128xf32, #tpu.memory_space<vmem>>, vector<2x128xf32>
    tpu.vector_store %arg18[%c0_23, %c0_24], %28 {strides = array<i32>} : memref<2x128xf32, #tpu.memory_space<vmem>>, vector<2x128xf32>,
    %c0_25 = arith.constant 0 : index
    %c0_26 = arith.constant 0 : index
    %31 = vector.load %arg10[%c0_25, %c0_26] : memref<4x128xf32, #tpu.memory_space<vmem>>, vector<4x128xf32>
    %cst_27 = arith.constant 9.990000e-01 : f32
    %32 = vector.broadcast %cst_27 : f32 to vector<4x128xf32>
    %33 = arith.mulf %32, %31 : vector<4x128xf32>
    %c0_28 = arith.constant 0 : index
    %c0_29 = arith.constant 0 : index
    %34 = vector.load %arg4[%c0_28, %c0_29] : memref<4x128xf32, #tpu.memory_space<vmem>>, vector<4x128xf32>
    %cst_30 = arith.constant 1.000000e-03 : f32
    %35 = vector.broadcast %cst_30 : f32 to vector<4x128xf32>
    %36 = arith.mulf %35, %34 : vector<4x128xf32>
    %37 = arith.addf %33, %36 : vector<4x128xf32>
    %c0_31 = arith.constant 0 : index
    %c0_32 = arith.constant 0 : index
    %38 = vector.load %arg21[%c0_31, %c0_32] : memref<4x128xf32, #tpu.memory_space<vmem>>, vector<4x128xf32>
    tpu.vector_store %arg21[%c0_31, %c0_32], %37 {strides = array<i32>} : memref<4x128xf32, #tpu.memory_space<vmem>>, vector<4x128xf32>,
    %c0_33 = arith.constant 0 : index
    %c0_34 = arith.constant 0 : index
    %39 = vector.load %arg11[%c0_33, %c0_34] : memref<1x128xf32, #tpu.memory_space<vmem>>, vector<1x128xf32>
    %cst_35 = arith.constant 9.990000e-01 : f32
    %40 = vector.broadcast %cst_35 : f32 to vector<1x128xf32>
    %41 = arith.mulf %40, %39 : vector<1x128xf32>
    %c0_36 = arith.constant 0 : index
    %c0_37 = arith.constant 0 : index
    %42 = vector.load %arg5[%c0_36, %c0_37] : memref<1x128xf32, #tpu.memory_space<vmem>>, vector<1x128xf32>
    %cst_38 = arith.constant 1.000000e-03 : f32
    %43 = vector.broadcast %cst_38 : f32 to vector<1x128xf32>
    %44 = arith.mulf %43, %42 : vector<1x128xf32>
    %45 = arith.addf %41, %44 : vector<1x128xf32>
    %c0_39 = arith.constant 0 : index
    %c0_40 = arith.constant 0 : index
    %46 = vector.load %arg22[%c0_39, %c0_40] : memref<1x128xf32, #tpu.memory_space<vmem>>, vector<1x128xf32>
    tpu.vector_store %arg22[%c0_39, %c0_40], %45 {strides = array<i32>} : memref<1x128xf32, #tpu.memory_space<vmem>>, vector<1x128xf32>,
    %c0_41 = arith.constant 0 : index
    %c0_42 = arith.constant 0 : index
    %47 = vector.load %arg12[%c0_41, %c0_42] : memref<128x128xf32, #tpu.memory_space<vmem>>, vector<128x128xf32>
    %cst_43 = arith.constant 9.990000e-01 : f32
    %48 = vector.broadcast %cst_43 : f32 to vector<128x128xf32>
    %49 = arith.mulf %48, %47 : vector<128x128xf32>
    %c0_44 = arith.constant 0 : index
    %c0_45 = arith.constant 0 : index
    %50 = vector.load %arg6[%c0_44, %c0_45] : memref<128x128xf32, #tpu.memory_space<vmem>>, vector<128x128xf32>
    %cst_46 = arith.constant 1.000000e-03 : f32
    %51 = vector.broadcast %cst_46 : f32 to vector<128x128xf32>
    %52 = arith.mulf %51, %50 : vector<128x128xf32>
    %53 = arith.addf %49, %52 : vector<128x128xf32>
    %c0_47 = arith.constant 0 : index
    %c0_48 = arith.constant 0 : index
    %54 = vector.load %arg23[%c0_47, %c0_48] : memref<128x128xf32, #tpu.memory_space<vmem>>, vector<128x128xf32>
    tpu.vector_store %arg23[%c0_47, %c0_48], %53 {strides = array<i32>} : memref<128x128xf32, #tpu.memory_space<vmem>>, vector<128x128xf32>,
    %c0_49 = arith.constant 0 : index
    %c0_50 = arith.constant 0 : index
    %55 = vector.load %arg13[%c0_49, %c0_50] : memref<1x128xf32, #tpu.memory_space<vmem>>, vector<1x128xf32>
    %cst_51 = arith.constant 9.990000e-01 : f32
    %56 = vector.broadcast %cst_51 : f32 to vector<1x128xf32>
    %57 = arith.mulf %56, %55 : vector<1x128xf32>
    %c0_52 = arith.constant 0 : index
    %c0_53 = arith.constant 0 : index
    %58 = vector.load %arg7[%c0_52, %c0_53] : memref<1x128xf32, #tpu.memory_space<vmem>>, vector<1x128xf32>
    %cst_54 = arith.constant 1.000000e-03 : f32
    %59 = vector.broadcast %cst_54 : f32 to vector<1x128xf32>
    %60 = arith.mulf %59, %58 : vector<1x128xf32>
    %61 = arith.addf %57, %60 : vector<1x128xf32>
    %c0_55 = arith.constant 0 : index
    %c0_56 = arith.constant 0 : index
    %62 = vector.load %arg24[%c0_55, %c0_56] : memref<1x128xf32, #tpu.memory_space<vmem>>, vector<1x128xf32>
    tpu.vector_store %arg24[%c0_55, %c0_56], %61 {strides = array<i32>} : memref<1x128xf32, #tpu.memory_space<vmem>>, vector<1x128xf32>,
    %c0_57 = arith.constant 0 : index
    %c0_58 = arith.constant 0 : index
    %63 = vector.load %arg14[%c0_57, %c0_58] : memref<128x128xf32, #tpu.memory_space<vmem>>, vector<128x128xf32>
    %cst_59 = arith.constant 9.990000e-01 : f32
    %64 = vector.broadcast %cst_59 : f32 to vector<128x128xf32>
    %65 = arith.mulf %64, %63 : vector<128x128xf32>
    %c0_60 = arith.constant 0 : index
    %c0_61 = arith.constant 0 : index
    %66 = vector.load %arg8[%c0_60, %c0_61] : memref<128x128xf32, #tpu.memory_space<vmem>>, vector<128x128xf32>
    %cst_62 = arith.constant 1.000000e-03 : f32
    %67 = vector.broadcast %cst_62 : f32 to vector<128x128xf32>
    %68 = arith.mulf %67, %66 : vector<128x128xf32>
    %69 = arith.addf %65, %68 : vector<128x128xf32>
    %c0_63 = arith.constant 0 : index
    %c0_64 = arith.constant 0 : index
    %70 = vector.load %arg25[%c0_63, %c0_64] : memref<128x128xf32, #tpu.memory_space<vmem>>, vector<128x128xf32>
    tpu.vector_store %arg25[%c0_63, %c0_64], %69 {strides = array<i32>} : memref<128x128xf32, #tpu.memory_space<vmem>>, vector<128x128xf32>,
    %c0_65 = arith.constant 0 : index
    %c0_66 = arith.constant 0 : index
    %71 = vector.load %arg15[%c0_65, %c0_66] : memref<1x128xf32, #tpu.memory_space<vmem>>, vector<1x128xf32>
    %cst_67 = arith.constant 9.990000e-01 : f32
    %72 = vector.broadcast %cst_67 : f32 to vector<1x128xf32>
    %73 = arith.mulf %72, %71 : vector<1x128xf32>
    %c0_68 = arith.constant 0 : index
    %c0_69 = arith.constant 0 : index
    %74 = vector.load %arg9[%c0_68, %c0_69] : memref<1x128xf32, #tpu.memory_space<vmem>>, vector<1x128xf32>
    %cst_70 = arith.constant 1.000000e-03 : f32
    %75 = vector.broadcast %cst_70 : f32 to vector<1x128xf32>
    %76 = arith.mulf %75, %74 : vector<1x128xf32>
    %77 = arith.addf %73, %76 : vector<1x128xf32>
    %c0_71 = arith.constant 0 : index
    %c0_72 = arith.constant 0 : index
    %78 = vector.load %arg26[%c0_71, %c0_72] : memref<1x128xf32, #tpu.memory_space<vmem>>, vector<1x128xf32>
    tpu.vector_store %arg26[%c0_71, %c0_72], %77 {strides = array<i32>} : memref<1x128xf32, #tpu.memory_space<vmem>>, vector<1x128xf32>,
    %c0_73 = arith.constant 0 : index
    %c0_74 = arith.constant 0 : index
    %79 = vector.load %arg2[%c0_73, %c0_74] : memref<2x2xf32, #tpu.memory_space<vmem>>, vector<2x2xf32>
    %cst_75 = arith.constant dense<0.000000e+00> : vector<2x4xf32>
    %80 = tpu.matmul %79, %3, %cst_75 {dimension_numbers = #tpu.dot_dimension_numbers<[1], [0], [0], [1], [0, 0, 1, 1], [], []>} : vector<2x2xf32>, vector<2x4xf32>, vector<2x4xf32> -> vector<2x4xf32>
    %cst_76 = arith.constant dense<0.000000e+00> : vector<2x128xf32>
    %81 = tpu.matmul %80, %37, %cst_76 {dimension_numbers = #tpu.dot_dimension_numbers<[1], [0], [0], [1], [0, 0, 1, 1], [], []>} : vector<2x4xf32>, vector<4x128xf32>, vector<2x128xf32> -> vector<2x128xf32>
    %82 = vector.broadcast %45 : vector<1x128xf32> to vector<2x128xf32>
    %83 = arith.addf %81, %82 : vector<2x128xf32>
    %cst_77 = arith.constant dense<0.000000e+00> : vector<2x128xf32>
    %84 = tpu.matmul %83, %53, %cst_77 {dimension_numbers = #tpu.dot_dimension_numbers<[1], [0], [0], [1], [0, 0, 1, 1], [], []>} : vector<2x128xf32>, vector<128x128xf32>, vector<2x128xf32> -> vector<2x128xf32>
    %85 = vector.broadcast %61 : vector<1x128xf32> to vector<2x128xf32>
    %86 = arith.addf %84, %85 : vector<2x128xf32>
    %cst_78 = arith.constant 0.000000e+00 : f32
    %87 = vector.broadcast %cst_78 : f32 to vector<2x128xf32>
    %88 = arith.maximumf %86, %87 : vector<2x128xf32>
    %cst_79 = arith.constant dense<0.000000e+00> : vector<2x128xf32>
    %89 = tpu.matmul %88, %69, %cst_79 {dimension_numbers = #tpu.dot_dimension_numbers<[1], [0], [0], [1], [0, 0, 1, 1], [], []>} : vector<2x128xf32>, vector<128x128xf32>, vector<2x128xf32> -> vector<2x128xf32>
    %90 = vector.broadcast %77 : vector<1x128xf32> to vector<2x128xf32>
    %91 = arith.addf %89, %90 : vector<2x128xf32>
    %92 = arith.mulf %91, %91 : vector<2x128xf32>
    %cst_80 = arith.constant dense<0.000000e+00> : vector<2xf32>
    %93 = vector.multi_reduction <add>, %92, %cst_80 [1] : vector<2x128xf32> to vector<2xf32>
    %94 = vector.shape_cast %93 : vector<2xf32> to vector<2x1xf32>
    %cst_81 = arith.constant 1.000000e-24 : f32
    %95 = vector.broadcast %cst_81 : f32 to vector<2x1xf32>
    %96 = arith.maximumf %94, %95 : vector<2x1xf32>
    %97 = math.rsqrt %96 : vector<2x1xf32>
    %98 = vector.broadcast %97 : vector<2x1xf32> to vector<2x128xf32>
    %99 = arith.mulf %91, %98 : vector<2x128xf32>
    %c0_82 = arith.constant 0 : index
    %c0_83 = arith.constant 0 : index
    %100 = vector.load %arg3[%c0_82, %c0_83] : memref<2x2xf32, #tpu.memory_space<vmem>>, vector<2x2xf32>
    %cst_84 = arith.constant dense<0.000000e+00> : vector<2x128xf32>
    %101 = tpu.matmul %100, %99, %cst_84 {dimension_numbers = #tpu.dot_dimension_numbers<[1], [0], [0], [1], [0, 0, 1, 1], [], []>} : vector<2x2xf32>, vector<2x128xf32>, vector<2x128xf32> -> vector<2x128xf32>
    %c0_85 = arith.constant 0 : index
    %c0_86 = arith.constant 0 : index
    %102 = vector.load %arg19[%c0_85, %c0_86] : memref<2x128xf32, #tpu.memory_space<vmem>>, vector<2x128xf32>
    tpu.vector_store %arg19[%c0_85, %c0_86], %101 {strides = array<i32>} : memref<2x128xf32, #tpu.memory_space<vmem>>, vector<2x128xf32>,
    %c0_87 = arith.constant 0 : index
    %c0_88 = arith.constant 0 : index
    %103 = vector.load %arg16[%c0_87, %c0_88] : memref<128x128xf32, #tpu.memory_space<vmem>>, vector<128x128xf32>
    %104 = arith.mulf %28, %101 : vector<2x128xf32>
    %cst_89 = arith.constant dense<0.000000e+00> : vector<2xf32>
    %105 = vector.multi_reduction <add>, %104, %cst_89 [1] : vector<2x128xf32> to vector<2xf32>
    %106 = vector.shape_cast %105 : vector<2xf32> to vector<2x1xf32>
    %cst_90 = arith.constant dense<0.000000e+00> : vector<2x128xf32>
    %107 = tpu.matmul %28, %103, %cst_90 {dimension_numbers = #tpu.dot_dimension_numbers<[1], [1], [0], [0], [0, 0, 1, 0], [], []>} : vector<2x128xf32>, vector<128x128xf32>, vector<2x128xf32> -> vector<2x128xf32>
    %cst_91 = arith.constant 0.000000e+00 : f32
    %108 = vector.broadcast %cst_91 : f32 to vector<2x127xf32>
    %109 = tpu.concatenate %106, %107, %108 in 1 : vector<2x1xf32>, vector<2x128xf32>, vector<2x127xf32> -> vector<2x256xf32>
    %cst_92 = arith.constant 14.2857141 : f32
    %110 = vector.broadcast %cst_92 : f32 to vector<2x256xf32>
    %111 = arith.mulf %109, %110 : vector<2x256xf32>
    %c0_93 = arith.constant 0 : index
    %c0_94 = arith.constant 0 : index
    %112 = vector.load %arg20[%c0_93, %c0_94] : memref<2x256xf32, #tpu.memory_space<vmem>>, vector<2x256xf32>
    tpu.vector_store %arg20[%c0_93, %c0_94], %111 {strides = array<i32>} : memref<2x256xf32, #tpu.memory_space<vmem>>, vector<2x256xf32>,
    %c0_95 = arith.constant 0 : index
    %113 = memref.load %arg0[%c0_95] : memref<1xi32, #tpu.memory_space<smem>>
    %114 = tpu.iota {dimensions = array<i32: 0>} : vector<128x2xi32>
    %115 = tpu.iota {dimensions = array<i32: 1>} : vector<128x2xi32>
    %116 = vector.broadcast %113 : i32 to vector<128x2xi32>
    %117 = arith.addi %115, %116 : vector<128x2xi32>
    %118 = arith.cmpi eq, %114, %117 : vector<128x2xi32>
    %119 = arith.extui %118 : vector<128x2xi1> to vector<128x2xi32>
    %120 = arith.sitofp %119 : vector<128x2xi32> to vector<128x2xf32>
    %cst_96 = arith.constant dense<0.000000e+00> : vector<128x128xf32>
    %121 = tpu.matmul %120, %101, %cst_96 {dimension_numbers = #tpu.dot_dimension_numbers<[1], [0], [0], [1], [0, 0, 1, 1], [], []>} : vector<128x2xf32>, vector<2x128xf32>, vector<128x128xf32> -> vector<128x128xf32>
    %122 = tpu.iota {dimensions = array<i32: 0>} : vector<128x128xi32>
    %123 = vector.broadcast %113 : i32 to vector<128x128xi32>
    %124 = arith.cmpi sge, %122, %123 : vector<128x128xi32>
    %c2_i32 = arith.constant 2 : i32
    %125 = arith.addi %113, %c2_i32 : i32
    %126 = vector.broadcast %125 : i32 to vector<128x128xi32>
    %127 = arith.cmpi slt, %122, %126 : vector<128x128xi32>
    %128 = arith.andi %124, %127 : vector<128x128xi1>
    %129 = arith.select %128, %121, %103 : vector<128x128xi1>, vector<128x128xf32>
    %c0_97 = arith.constant 0 : index
    %c0_98 = arith.constant 0 : index
    %130 = vector.load %arg27[%c0_97, %c0_98] : memref<128x128xf32, #tpu.memory_space<vmem>>, vector<128x128xf32>
    tpu.vector_store %arg27[%c0_97, %c0_98], %129 {strides = array<i32>} : memref<128x128xf32, #tpu.memory_space<vmem>>, vector<128x128xf32>,
    return
  }
}

</mosaic_0001>

<llo_original>
// kernel: forward.1
$region0: #{forward.1}
  #allocation0 [shape = 'u32[]', space=smem, size = 0x4, offset = 0x4, fixed_abs, tag = 'smem constant byte address 0x4 - core index']
  #allocation1 [shape = 'u32[72,128]{1,0:T(1,128)}', space=vmem, size = 0x9000, scoped, tag = 'internal scratch']
  #allocation2 [shape = 's32[1]{0:T(128)S(6)}', space=smem, size = 0x200, scoped, tag = 'scoped memory for forward.1']
  %s0 = inlined_call_operand.<no memory space> [shape: s32[1], index: 0, kind: input, shape index: {}]
  %s1 = inlined_call_operand.vmem [shape: f32[2,4,256], index: 1, kind: input, shape index: {}]
  %s2 = inlined_call_operand.vmem [shape: f32[2,2], index: 2, kind: input, shape index: {}]
  %s3 = inlined_call_operand.vmem [shape: f32[2,2], index: 3, kind: input, shape index: {}]
  %s4 = inlined_call_operand.vmem [shape: f32[4,128], index: 4, kind: input, shape index: {}]
  %s5 = inlined_call_operand.vmem [shape: f32[1,128], index: 5, kind: input, shape index: {}]
  %s6 = inlined_call_operand.vmem [shape: f32[128,128], index: 6, kind: input, shape index: {}]
  %s7 = inlined_call_operand.vmem [shape: f32[1,128], index: 7, kind: input, shape index: {}]
  %s8 = inlined_call_operand.vmem [shape: f32[128,128], index: 8, kind: input, shape index: {}]
  %s9 = inlined_call_operand.vmem [shape: f32[1,128], index: 9, kind: input, shape index: {}]
  %s10 = inlined_call_operand.vmem [shape: f32[4,128], index: 10, kind: input, shape index: {}, may-alias: {10,21}]
  %s11 = inlined_call_operand.vmem [shape: f32[1,128], index: 11, kind: input, shape index: {}, may-alias: {11,22}]
  %s12 = inlined_call_operand.vmem [shape: f32[128,128], index: 12, kind: input, shape index: {}, may-alias: {12,23}]
  %s13 = inlined_call_operand.vmem [shape: f32[1,128], index: 13, kind: input, shape index: {}, may-alias: {13,24}]
  %s14 = inlined_call_operand.vmem [shape: f32[128,128], index: 14, kind: input, shape index: {}, may-alias: {14,25}]
  %s15 = inlined_call_operand.vmem [shape: f32[1,128], index: 15, kind: input, shape index: {}, may-alias: {15,26}]
  %s16 = inlined_call_operand.vmem [shape: f32[128,128], index: 16, kind: input, shape index: {}, may-alias: {16,27}]
  %s17 = inlined_call_operand.hbm [shape: f32[2,128], index: 17, kind: output, shape index: {0}]
  %s18 = inlined_call_operand.hbm [shape: f32[2,128], index: 18, kind: output, shape index: {1}]
  %s19 = inlined_call_operand.hbm [shape: f32[2,128], index: 19, kind: output, shape index: {2}]
  %s20 = inlined_call_operand.hbm [shape: f32[2,256], index: 20, kind: output, shape index: {3}]
  %s21 = inlined_call_operand.vmem [shape: f32[4,128], index: 21, kind: output, shape index: {4}, may-alias: {10,21}]
  %s22 = inlined_call_operand.vmem [shape: f32[1,128], index: 22, kind: output, shape index: {5}, may-alias: {11,22}]
  %s23 = inlined_call_operand.vmem [shape: f32[128,128], index: 23, kind: output, shape index: {6}, may-alias: {12,23}]
  %s24 = inlined_call_operand.vmem [shape: f32[1,128], index: 24, kind: output, shape index: {7}, may-alias: {13,24}]
  %s25 = inlined_call_operand.vmem [shape: f32[128,128], index: 25, kind: output, shape index: {8}, may-alias: {14,25}]
  %s26 = inlined_call_operand.vmem [shape: f32[1,128], index: 26, kind: output, shape index: {9}, may-alias: {15,26}]
  %s27 = inlined_call_operand.vmem [shape: f32[128,128], index: 27, kind: output, shape index: {10}, may-alias: {16,27}]
  %28 = xla_tuple %s17, %s18, %s19, %s20, %s21, %s22, %s23, %s24, %s25, %s26, %s27
  %s29 = sld [smem:[#allocation0]]
  $region158: #{forward.1} parent=0
    _
  %s31 = ssub.s32 1, %s29
  %s32 = scalar_select 0, %s31, %s29
  %33 = sst [smem:[#allocation2]] %s0
  $region1: #{forward.1} parent=0
    #allocation3 [shape = 'u8[1024]{0}', space=vmem, size = 0x400, scoped, tag = 'output window, operand 0, single buffered']
    #allocation4 [shape = 's32[1]{0}', space=sflag, size = 0x4, scoped, tag = 'scoped memory for forward.1']
    #allocation5 [shape = 'u8[1024]{0}', space=vmem, size = 0x400, scoped, tag = 'output window, operand 1, single buffered']
    #allocation6 [shape = 's32[1]{0}', space=sflag, size = 0x4, scoped, tag = 'scoped memory for forward.1']
    #allocation7 [shape = 'u8[1024]{0}', space=vmem, size = 0x400, scoped, tag = 'output window, operand 2, single buffered']
    #allocation8 [shape = 'u8[2048]{0}', space=vmem, size = 0x800, scoped, tag = 'output window, operand 3, single buffered']
    #allocation9 [shape = 's32[1]{0}', space=sflag, size = 0x4, scoped, tag = 'scoped memory for forward.1']
    %34 = vsyncpa [#allocation4], 0
    %35 = vsyncpa [#allocation6], 0
    %36 = vsyncpa [#allocation9], 0
    // Predicated region
    $region2: #{forward.1} parent=1 // pred_check
      _
    $region3: #{forward.1} parent=1 // pred_check_branch
      %38 = sbr.rel (0) target = $region5
    $region4: #{forward.1} parent=1 // pred_region
      _
    $region5: #{forward.1} parent=1 // pred_fallthru
      _
    // Predicated region
    $region6: #{forward.1} parent=1 // pred_check
      _
    $region7: #{forward.1} parent=1 // pred_check_branch
      %40 = sbr.rel (0) target = $region9
    $region8: #{forward.1} parent=1 // pred_region
      _
    $region9: #{forward.1} parent=1 // pred_fallthru
      _
    // Predicated region
    $region10: #{forward.1} parent=1 // pred_check
      _
    $region11: #{forward.1} parent=1 // pred_check_branch
      %42 = sbr.rel (0) target = $region13
    $region12: #{forward.1} parent=1 // pred_region
      _
    $region13: #{forward.1} parent=1 // pred_fallthru
      _
    // Predicated region
    $region14: #{forward.1} parent=1 // pred_check
      _
    $region15: #{forward.1} parent=1 // pred_check_branch
      %44 = sbr.rel (0) target = $region17
    $region16: #{forward.1} parent=1 // pred_region
      _
    $region17: #{forward.1} parent=1 // pred_fallthru
      _
    // Predicated region
    $region18: #{forward.1} parent=1 // pred_check
      _
    $region19: #{forward.1} parent=1 // pred_check_branch
      %46 = sbr.rel (0) target = $region21
    $region20: #{forward.1} parent=1 // pred_region
      _
    $region21: #{forward.1} parent=1 // pred_fallthru
      _
    // Predicated region
    $region22: #{forward.1} parent=1 // pred_check
      _
    $region23: #{forward.1} parent=1 // pred_check_branch
      %48 = sbr.rel (0) target = $region25
    $region24: #{forward.1} parent=1 // pred_region
      _
    $region25: #{forward.1} parent=1 // pred_fallthru
      _
    // Predicated region
    $region26: #{forward.1} parent=1 // pred_check
      _
    $region27: #{forward.1} parent=1 // pred_check_branch
      %50 = sbr.rel (0) target = $region29
    $region28: #{forward.1} parent=1 // pred_region
      _
    $region29: #{forward.1} parent=1 // pred_fallthru
      _
    // Predicated region
    $region30: #{forward.1} parent=1 // pred_check
      _
    $region31: #{forward.1} parent=1 // pred_check_branch
      %52 = sbr.rel (0) target = $region33
    $region32: #{forward.1} parent=1 // pred_region
      _
    $region33: #{forward.1} parent=1 // pred_fallthru
      _
    // Predicated region
    $region34: #{forward.1} parent=1 // pred_check
      _
    $region35: #{forward.1} parent=1 // pred_check_branch
      %54 = sbr.rel (0) target = $region37
    $region36: #{forward.1} parent=1 // pred_region
      _
    $region37: #{forward.1} parent=1 // pred_fallthru
      _
    // Predicated region
    $region38: #{forward.1} parent=1 // pred_check
      _
    $region39: #{forward.1} parent=1 // pred_check_branch
      %56 = sbr.rel (0) target = $region41
    $region40: #{forward.1} parent=1 // pred_region
      _
    $region41: #{forward.1} parent=1 // pred_fallthru
      _
    // Predicated region
    $region42: #{forward.1} parent=1 // pred_check
      _
    $region43: #{forward.1} parent=1 // pred_check_branch
      %58 = sbr.rel (0) target = $region45
    $region44: #{forward.1} parent=1 // pred_region
      _
    $region45: #{forward.1} parent=1 // pred_fallthru
      _
    // Predicated region
    $region46: #{forward.1} parent=1 // pred_check
      _
    $region47: #{forward.1} parent=1 // pred_check_branch
      %60 = sbr.rel (0) target = $region49
    $region48: #{forward.1} parent=1 // pred_region
      _
    $region49: #{forward.1} parent=1 // pred_fallthru
      _
    // Predicated region
    $region50: #{forward.1} parent=1 // pred_check
      _
    $region51: #{forward.1} parent=1 // pred_check_branch
      %62 = sbr.rel (0) target = $region53
    $region52: #{forward.1} parent=1 // pred_region
      _
    $region53: #{forward.1} parent=1 // pred_fallthru
      _
    // Predicated region
    $region54: #{forward.1} parent=1 // pred_check
      _
    $region55: #{forward.1} parent=1 // pred_check_branch
      %64 = sbr.rel (0) target = $region57
    $region56: #{forward.1} parent=1 // pred_region
      _
    $region57: #{forward.1} parent=1 // pred_fallthru
      _
    // Predicated region
    $region58: #{forward.1} parent=1 // pred_check
      _
    $region59: #{forward.1} parent=1 // pred_check_branch
      %66 = sbr.rel (0) target = $region61
    $region60: #{forward.1} parent=1 // pred_region
      _
    $region61: #{forward.1} parent=1 // pred_fallthru
      _
    // Predicated region
    $region62: #{forward.1} parent=1 // pred_check
      _
    $region63: #{forward.1} parent=1 // pred_check_branch
      %68 = sbr.rel (0) target = $region65
    $region64: #{forward.1} parent=1 // pred_region
      _
    $region65: #{forward.1} parent=1 // pred_fallthru
      _
    // Predicated region
    $region66: #{forward.1} parent=1 // pred_check
      _
    $region67: #{forward.1} parent=1 // pred_check_branch
      %70 = sbr.rel (0) target = $region69
    $region68: #{forward.1} parent=1 // pred_region
      _
    $region69: #{forward.1} parent=1 // pred_fallthru
      _
    %v71 = vld [vmem:[%s1] sm:$0xff]
    %v72 = vld [vmem:[%s1 + $0x8] sm:$0xff]
    %75 = vst [vmem:[#allocation1] ss:$2 sm:$0xff] %v71
    %v76 = vld.sshfl [vmem:[#allocation1] sm:$0xff pattern:$0x75316420]
    %v77 = vld.sshfl [vmem:[#allocation1 + $0x8] sm:$0xff pattern:$0x75316420]
    %s78 = scalar_lea.vmem [#allocation1], 16
    %79 = vst [vmem:[%s78] ss:$2 sm:$0xff] %v72
    %v80 = vld.sshfl [vmem:[#allocation1 + $0x10] sm:$0xff pattern:$0x75316420]
    %v81 = vld.sshfl [vmem:[#allocation1 + $0x18] sm:$0xff pattern:$0x75316420]
    %vm86 = vcmask 1043456
    %v87 = vsel %vm86, %v76, 0.0
    %v88 = vsel %vm86, %v77, 0.0
    %v89 = vadd.f32 %v87, %v88
    %90 = vadd.xlane.f32.xlu0 %v89
    %v91 = vpop.xlane.xlu0 %90
    %v92 = vsel %vm86, %v80, 0.0
    %v93 = vsel %vm86, %v81, 0.0
    %v94 = vadd.f32 %v92, %v93
    %95 = vadd.xlane.f32.xlu0 %v94
    %v96 = vpop.xlane.xlu0 %95
    %v97 = vrcp.pop 256.0
    %v98 = vmul.f32 256.0, %v97
    %v99 = vsub.f32 1.0, %v98
    %v100 = vmul.f32 %v97, %v99
    %v101 = vadd.f32 %v97, %v100
    %vm102 = vweird.f32 %v97
    %v103 = vsel %vm102, %v97, %v101
    %v104 = vmul.f32 %v91, %v103
    %v105 = vmul.f32 %v96, %v103
    %v106 = vld [vmem:[%s4] sm:$0xf]
    %v107 = vld [vmem:[%s5] sm:$0x1]
    %v108 = vld [vmem:[%s6] sm:$0xff]
    %v109 = vld [vmem:[%s6 + $0x8] sm:$0xff]
    %v110 = vld [vmem:[%s6 + $0x10] sm:$0xff]
    %v111 = vld [vmem:[%s6 + $0x18] sm:$0xff]
    %v112 = vld [vmem:[%s6 + $0x20] sm:$0xff]
    %v113 = vld [vmem:[%s6 + $0x28] sm:$0xff]
    %v114 = vld [vmem:[%s6 + $0x30] sm:$0xff]
    %v115 = vld [vmem:[%s6 + $0x38] sm:$0xff]
    %v116 = vld [vmem:[%s6 + $0x40] sm:$0xff]
    %v117 = vld [vmem:[%s6 + $0x48] sm:$0xff]
    %v118 = vld [vmem:[%s6 + $0x50] sm:$0xff]
    %v119 = vld [vmem:[%s6 + $0x58] sm:$0xff]
    %v120 = vld [vmem:[%s6 + $0x60] sm:$0xff]
    %v121 = vld [vmem:[%s6 + $0x68] sm:$0xff]
    %v122 = vld [vmem:[%s6 + $0x70] sm:$0xff]
    %v123 = vld [vmem:[%s6 + $0x78] sm:$0xff]
    %v124 = vld [vmem:[%s7] sm:$0x1]
    %v125 = vld [vmem:[%s8] sm:$0xff]
    %v126 = vld [vmem:[%s8 + $0x8] sm:$0xff]
    %v127 = vld [vmem:[%s8 + $0x10] sm:$0xff]
    %v128 = vld [vmem:[%s8 + $0x18] sm:$0xff]
    %v129 = vld [vmem:[%s8 + $0x20] sm:$0xff]
    %v130 = vld [vmem:[%s8 + $0x28] sm:$0xff]
    %v131 = vld [vmem:[%s8 + $0x30] sm:$0xff]
    %v132 = vld [vmem:[%s8 + $0x38] sm:$0xff]
    %v133 = vld [vmem:[%s8 + $0x40] sm:$0xff]
    %v134 = vld [vmem:[%s8 + $0x48] sm:$0xff]
    %v135 = vld [vmem:[%s8 + $0x50] sm:$0xff]
    %v136 = vld [vmem:[%s8 + $0x58] sm:$0xff]
    %v137 = vld [vmem:[%s8 + $0x60] sm:$0xff]
    %v138 = vld [vmem:[%s8 + $0x68] sm:$0xff]
    %v139 = vld [vmem:[%s8 + $0x70] sm:$0xff]
    %v140 = vld [vmem:[%s8 + $0x78] sm:$0xff]
    %v141 = vld [vmem:[%s9] sm:$0x1]
    %v143 = vperm.slane %v107, 0
    %v147 = vlaneseq
    %v148 = vand.u32 %v147, 127
    %v149 = vperm.slane %v104, %v148
    %v150 = vperm.slane %v105, %v148
    %vm151 = vcmask 1041409
    %v152 = vsel %vm151, %v150, %v149
    %vm153 = vcmask 31744
    %v154 = vsel %vm153, %v152, 0
    %v157 = vsel %vm86, %v106, 0
    %159 = vmatpush.msra.mxu0 0.0
    %160 = vmatpush.msra.mxu0 0.0
    %161 = vmatpush.msra.mxu0 0.0
    %162 = vmatpush.msra.mxu0 0.0
    %163 = vmatpush.msra.mxu0 0.0
    %164 = vmatpush.msra.mxu0 0.0
    %165 = vmatpush.msra.mxu0 0.0
    %166 = vmatpush.msra.mxu0 0.0
    %167 = vmatpush.msra.mxu0 0.0
    %168 = vmatpush.msra.mxu0 0.0
    %169 = vmatpush.msra.mxu0 0.0
    %170 = vmatpush.msra.mxu0 0.0
    %171 = vmatpush.msra.mxu0 0.0
    %172 = vmatpush.msra.mxu0 0.0
    %173 = vmatpush.msra.mxu0 0.0
    %174 = vmatpush.msra.mxu0 %v157
    %175 = vmatmul.f32.gmra.mxu0 %v154
    %v176 = vpop.f32.mrf.mxu0
    %v177 = vadd.f32 %v143, %v176
    %178 = vdwg.mxu0
    %v180 = vperm.slane %v124, 0
    %182 = vmatpush.msra.mxu0 %v123
    %183 = vmatpush.msra.mxu0 %v122
    %184 = vmatpush.msra.mxu0 %v121
    %185 = vmatpush.msra.mxu0 %v120
    %186 = vmatpush.msra.mxu0 %v119
    %187 = vmatpush.msra.mxu0 %v118
    %188 = vmatpush.msra.mxu0 %v117
    %189 = vmatpush.msra.mxu0 %v116
    %190 = vmatpush.msra.mxu0 %v115
    %191 = vmatpush.msra.mxu0 %v114
    %192 = vmatpush.msra.mxu0 %v113
    %193 = vmatpush.msra.mxu0 %v112
    %194 = vmatpush.msra.mxu0 %v111
    %195 = vmatpush.msra.mxu0 %v110
    %196 = vmatpush.msra.mxu0 %v109
    %197 = vmatpush.msra.mxu0 %v108
    %198 = vmatmul.f32.gmra.mxu0 %v177
    %v199 = vpop.f32.mrf.mxu0
    %v200 = vadd.f32 %v180, %v199
    %201 = vdwg.mxu0
    %v202 = vmax.f32 %v200, 0.0
    %v204 = vperm.slane %v141, 0
    %206 = vmatpush.msra.mxu0 %v140
    %207 = vmatpush.msra.mxu0 %v139
    %208 = vmatpush.msra.mxu0 %v138
    %209 = vmatpush.msra.mxu0 %v137
    %210 = vmatpush.msra.mxu0 %v136
    %211 = vmatpush.msra.mxu0 %v135
    %212 = vmatpush.msra.mxu0 %v134
    %213 = vmatpush.msra.mxu0 %v133
    %214 = vmatpush.msra.mxu0 %v132
    %215 = vmatpush.msra.mxu0 %v131
    %216 = vmatpush.msra.mxu0 %v130
    %217 = vmatpush.msra.mxu0 %v129
    %218 = vmatpush.msra.mxu0 %v128
    %219 = vmatpush.msra.mxu0 %v127
    %220 = vmatpush.msra.mxu0 %v126
    %221 = vmatpush.msra.mxu0 %v125
    %222 = vmatmul.f32.gmra.mxu0 %v202
    %v223 = vpop.f32.mrf.mxu0
    %v224 = vadd.f32 %v204, %v223
    %225 = vdwg.mxu0
    %v226 = vmul.f32 %v224, %v224
    %vm227 = vcmask 1041408
    %v228 = vsel %vm227, %v226, 0.0
    %229 = vadd.xlane.f32.xlu0 %v228
    %v230 = vpop.xlane.xlu0 %229
    %v231 = vmax.f32 %v230, 1e-24
    %v232 = vrsqrt.pop %v231
    %v233 = vmul.f32 %v232, %v231
    %v234 = vmul.f32 %v233, %v232
    %v235 = vmul.f32 0.5, %v234
    %v236 = vsub.f32 1.5, %v235
    %v237 = vmul.f32 %v232, %v236
    %vm238 = vweird.f32 %v231
    %vm239 = vweird.f32 %v232
    %vm240 = vmor %vm238, %vm239
    %v241 = vsel %vm240, %v232, %v237
    %v242 = vmul.f32 %v224, %v241
    %243 = vst [vmem:[#allocation3] sm:$0x3] %v177
    %244 = vst [vmem:[#allocation5] sm:$0x3] %v242
    %v245 = vld [vmem:[%s10] sm:$0xf]
    %v246 = vmul.f32 %v245, 0.999
    %v247 = vld [vmem:[%s4] sm:$0xf]
    %v248 = vmul.f32 %v247, 0.001
    %v249 = vadd.f32 %v246, %v248
    %250 = vst [vmem:[%s21] sm:$0xf] %v249
    %v251 = vld [vmem:[%s11] sm:$0x1]
    %v252 = vmul.f32 %v251, 0.999
    %v253 = vld [vmem:[%s5] sm:$0x1]
    %v254 = vmul.f32 %v253, 0.001
    %v255 = vadd.f32 %v252, %v254
    %256 = vst [vmem:[%s22] sm:$0x1] %v255
    %v257 = vld [vmem:[%s12] sm:$0xff]
    %v258 = vld [vmem:[%s12 + $0x8] sm:$0xff]
    %v259 = vld [vmem:[%s12 + $0x10] sm:$0xff]
    %v260 = vld [vmem:[%s12 + $0x18] sm:$0xff]
    %v261 = vld [vmem:[%s12 + $0x20] sm:$0xff]
    %v262 = vld [vmem:[%s12 + $0x28] sm:$0xff]
    %v263 = vld [vmem:[%s12 + $0x30] sm:$0xff]
    %v264 = vld [vmem:[%s12 + $0x38] sm:$0xff]
    %v265 = vld [vmem:[%s12 + $0x40] sm:$0xff]
    %v266 = vld [vmem:[%s12 + $0x48] sm:$0xff]
    %v267 = vld [vmem:[%s12 + $0x50] sm:$0xff]
    %v268 = vld [vmem:[%s12 + $0x58] sm:$0xff]
    %v269 = vld [vmem:[%s12 + $0x60] sm:$0xff]
    %v270 = vld [vmem:[%s12 + $0x68] sm:$0xff]
    %v271 = vld [vmem:[%s12 + $0x70] sm:$0xff]
    %v272 = vld [vmem:[%s12 + $0x78] sm:$0xff]
    %v273 = vmul.f32 %v257, 0.999
    %v274 = vmul.f32 %v258, 0.999
    %v275 = vmul.f32 %v259, 0.999
    %v276 = vmul.f32 %v260, 0.999
    %v277 = vmul.f32 %v261, 0.999
    %v278 = vmul.f32 %v262, 0.999
    %v279 = vmul.f32 %v263, 0.999
    %v280 = vmul.f32 %v264, 0.999
    %v281 = vmul.f32 %v265, 0.999
    %v282 = vmul.f32 %v266, 0.999
    %v283 = vmul.f32 %v267, 0.999
    %v284 = vmul.f32 %v268, 0.999
    %v285 = vmul.f32 %v269, 0.999
    %v286 = vmul.f32 %v270, 0.999
    %v287 = vmul.f32 %v271, 0.999
    %v288 = vmul.f32 %v272, 0.999
    %v289 = vld [vmem:[%s6] sm:$0xff]
    %v290 = vld [vmem:[%s6 + $0x8] sm:$0xff]
    %v291 = vld [vmem:[%s6 + $0x10] sm:$0xff]
    %v292 = vld [vmem:[%s6 + $0x18] sm:$0xff]
    %v293 = vld [vmem:[%s6 + $0x20] sm:$0xff]
    %v294 = vld [vmem:[%s6 + $0x28] sm:$0xff]
    %v295 = vld [vmem:[%s6 + $0x30] sm:$0xff]
    %v296 = vld [vmem:[%s6 + $0x38] sm:$0xff]
    %v297 = vld [vmem:[%s6 + $0x40] sm:$0xff]
    %v298 = vld [vmem:[%s6 + $0x48] sm:$0xff]
    %v299 = vld [vmem:[%s6 + $0x50] sm:$0xff]
    %v300 = vld [vmem:[%s6 + $0x58] sm:$0xff]
    %v301 = vld [vmem:[%s6 + $0x60] sm:$0xff]
    %v302 = vld [vmem:[%s6 + $0x68] sm:$0xff]
    %v303 = vld [vmem:[%s6 + $0x70] sm:$0xff]
    %v304 = vld [vmem:[%s6 + $0x78] sm:$0xff]
    %v305 = vmul.f32 %v289, 0.001
    %v306 = vmul.f32 %v290, 0.001
    %v307 = vmul.f32 %v291, 0.001
    %v308 = vmul.f32 %v292, 0.001
    %v309 = vmul.f32 %v293, 0.001
    %v310 = vmul.f32 %v294, 0.001
    %v311 = vmul.f32 %v295, 0.001
    %v312 = vmul.f32 %v296, 0.001
    %v313 = vmul.f32 %v297, 0.001
    %v314 = vmul.f32 %v298, 0.001
    %v315 = vmul.f32 %v299, 0.001
    %v316 = vmul.f32 %v300, 0.001
    %v317 = vmul.f32 %v301, 0.001
    %v318 = vmul.f32 %v302, 0.001
    %v319 = vmul.f32 %v303, 0.001
    %v320 = vmul.f32 %v304, 0.001
    %v321 = vadd.f32 %v273, %v305
    %v322 = vadd.f32 %v274, %v306
    %v323 = vadd.f32 %v275, %v307
    %v324 = vadd.f32 %v276, %v308
    %v325 = vadd.f32 %v277, %v309
    %v326 = vadd.f32 %v278, %v310
    %v327 = vadd.f32 %v279, %v311
    %v328 = vadd.f32 %v280, %v312
    %v329 = vadd.f32 %v281, %v313
    %v330 = vadd.f32 %v282, %v314
    %v331 = vadd.f32 %v283, %v315
    %v332 = vadd.f32 %v284, %v316
    %v333 = vadd.f32 %v285, %v317
    %v334 = vadd.f32 %v286, %v318
    %v335 = vadd.f32 %v287, %v319
    %v336 = vadd.f32 %v288, %v320
    %337 = vst [vmem:[%s23] sm:$0xff] %v321
    %338 = vst [vmem:[%s23 + $0x8] sm:$0xff] %v322
    %339 = vst [vmem:[%s23 + $0x10] sm:$0xff] %v323
    %340 = vst [vmem:[%s23 + $0x18] sm:$0xff] %v324
    %341 = vst [vmem:[%s23 + $0x20] sm:$0xff] %v325
    %342 = vst [vmem:[%s23 + $0x28] sm:$0xff] %v326
    %343 = vst [vmem:[%s23 + $0x30] sm:$0xff] %v327
    %344 = vst [vmem:[%s23 + $0x38] sm:$0xff] %v328
    %345 = vst [vmem:[%s23 + $0x40] sm:$0xff] %v329
    %346 = vst [vmem:[%s23 + $0x48] sm:$0xff] %v330
    %347 = vst [vmem:[%s23 + $0x50] sm:$0xff] %v331
    %348 = vst [vmem:[%s23 + $0x58] sm:$0xff] %v332
    %349 = vst [vmem:[%s23 + $0x60] sm:$0xff] %v333
    %350 = vst [vmem:[%s23 + $0x68] sm:$0xff] %v334
    %351 = vst [vmem:[%s23 + $0x70] sm:$0xff] %v335
    %352 = vst [vmem:[%s23 + $0x78] sm:$0xff] %v336
    %v353 = vld [vmem:[%s13] sm:$0x1]
    %v354 = vmul.f32 %v353, 0.999
    %v355 = vld [vmem:[%s7] sm:$0x1]
    %v356 = vmul.f32 %v355, 0.001
    %v357 = vadd.f32 %v354, %v356
    %358 = vst [vmem:[%s24] sm:$0x1] %v357
    %v359 = vld [vmem:[%s14] sm:$0xff]
    %v360 = vld [vmem:[%s14 + $0x8] sm:$0xff]
    %v361 = vld [vmem:[%s14 + $0x10] sm:$0xff]
    %v362 = vld [vmem:[%s14 + $0x18] sm:$0xff]
    %v363 = vld [vmem:[%s14 + $0x20] sm:$0xff]
    %v364 = vld [vmem:[%s14 + $0x28] sm:$0xff]
    %v365 = vld [vmem:[%s14 + $0x30] sm:$0xff]
    %v366 = vld [vmem:[%s14 + $0x38] sm:$0xff]
    %v367 = vld [vmem:[%s14 + $0x40] sm:$0xff]
    %v368 = vld [vmem:[%s14 + $0x48] sm:$0xff]
    %v369 = vld [vmem:[%s14 + $0x50] sm:$0xff]
    %v370 = vld [vmem:[%s14 + $0x58] sm:$0xff]
    %v371 = vld [vmem:[%s14 + $0x60] sm:$0xff]
    %v372 = vld [vmem:[%s14 + $0x68] sm:$0xff]
    %v373 = vld [vmem:[%s14 + $0x70] sm:$0xff]
    %v374 = vld [vmem:[%s14 + $0x78] sm:$0xff]
    %v375 = vmul.f32 %v359, 0.999
    %v376 = vmul.f32 %v360, 0.999
    %v377 = vmul.f32 %v361, 0.999
    %v378 = vmul.f32 %v362, 0.999
    %v379 = vmul.f32 %v363, 0.999
    %v380 = vmul.f32 %v364, 0.999
    %v381 = vmul.f32 %v365, 0.999
    %v382 = vmul.f32 %v366, 0.999
    %v383 = vmul.f32 %v367, 0.999
    %v384 = vmul.f32 %v368, 0.999
    %v385 = vmul.f32 %v369, 0.999
    %v386 = vmul.f32 %v370, 0.999
    %v387 = vmul.f32 %v371, 0.999
    %v388 = vmul.f32 %v372, 0.999
    %v389 = vmul.f32 %v373, 0.999
    %v390 = vmul.f32 %v374, 0.999
    %v391 = vld [vmem:[%s8] sm:$0xff]
    %v392 = vld [vmem:[%s8 + $0x8] sm:$0xff]
    %v393 = vld [vmem:[%s8 + $0x10] sm:$0xff]
    %v394 = vld [vmem:[%s8 + $0x18] sm:$0xff]
    %v395 = vld [vmem:[%s8 + $0x20] sm:$0xff]
    %v396 = vld [vmem:[%s8 + $0x28] sm:$0xff]
    %v397 = vld [vmem:[%s8 + $0x30] sm:$0xff]
    %v398 = vld [vmem:[%s8 + $0x38] sm:$0xff]
    %v399 = vld [vmem:[%s8 + $0x40] sm:$0xff]
    %v400 = vld [vmem:[%s8 + $0x48] sm:$0xff]
    %v401 = vld [vmem:[%s8 + $0x50] sm:$0xff]
    %v402 = vld [vmem:[%s8 + $0x58] sm:$0xff]
    %v403 = vld [vmem:[%s8 + $0x60] sm:$0xff]
    %v404 = vld [vmem:[%s8 + $0x68] sm:$0xff]
    %v405 = vld [vmem:[%s8 + $0x70] sm:$0xff]
    %v406 = vld [vmem:[%s8 + $0x78] sm:$0xff]
    %v407 = vmul.f32 %v391, 0.001
    %v408 = vmul.f32 %v392, 0.001
    %v409 = vmul.f32 %v393, 0.001
    %v410 = vmul.f32 %v394, 0.001
    %v411 = vmul.f32 %v395, 0.001
    %v412 = vmul.f32 %v396, 0.001
    %v413 = vmul.f32 %v397, 0.001
    %v414 = vmul.f32 %v398, 0.001
    %v415 = vmul.f32 %v399, 0.001
    %v416 = vmul.f32 %v400, 0.001
    %v417 = vmul.f32 %v401, 0.001
    %v418 = vmul.f32 %v402, 0.001
    %v419 = vmul.f32 %v403, 0.001
    %v420 = vmul.f32 %v404, 0.001
    %v421 = vmul.f32 %v405, 0.001
    %v422 = vmul.f32 %v406, 0.001
    %v423 = vadd.f32 %v375, %v407
    %v424 = vadd.f32 %v376, %v408
    %v425 = vadd.f32 %v377, %v409
    %v426 = vadd.f32 %v378, %v410
    %v427 = vadd.f32 %v379, %v411
    %v428 = vadd.f32 %v380, %v412
    %v429 = vadd.f32 %v381, %v413
    %v430 = vadd.f32 %v382, %v414
    %v431 = vadd.f32 %v383, %v415
    %v432 = vadd.f32 %v384, %v416
    %v433 = vadd.f32 %v385, %v417
    %v434 = vadd.f32 %v386, %v418
    %v435 = vadd.f32 %v387, %v419
    %v436 = vadd.f32 %v388, %v420
    %v437 = vadd.f32 %v389, %v421
    %v438 = vadd.f32 %v390, %v422
    %439 = vst [vmem:[%s25] sm:$0xff] %v423
    %440 = vst [vmem:[%s25 + $0x8] sm:$0xff] %v424
    %441 = vst [vmem:[%s25 + $0x10] sm:$0xff] %v425
    %442 = vst [vmem:[%s25 + $0x18] sm:$0xff] %v426
    %443 = vst [vmem:[%s25 + $0x20] sm:$0xff] %v427
    %444 = vst [vmem:[%s25 + $0x28] sm:$0xff] %v428
    %445 = vst [vmem:[%s25 + $0x30] sm:$0xff] %v429
    %446 = vst [vmem:[%s25 + $0x38] sm:$0xff] %v430
    %447 = vst [vmem:[%s25 + $0x40] sm:$0xff] %v431
    %448 = vst [vmem:[%s25 + $0x48] sm:$0xff] %v432
    %449 = vst [vmem:[%s25 + $0x50] sm:$0xff] %v433
    %450 = vst [vmem:[%s25 + $0x58] sm:$0xff] %v434
    %451 = vst [vmem:[%s25 + $0x60] sm:$0xff] %v435
    %452 = vst [vmem:[%s25 + $0x68] sm:$0xff] %v436
    %453 = vst [vmem:[%s25 + $0x70] sm:$0xff] %v437
    %454 = vst [vmem:[%s25 + $0x78] sm:$0xff] %v438
    %v455 = vld [vmem:[%s15] sm:$0x1]
    %v456 = vmul.f32 %v455, 0.999
    %v457 = vld [vmem:[%s9] sm:$0x1]
    %v458 = vmul.f32 %v457, 0.001
    %v459 = vadd.f32 %v456, %v458
    %460 = vst [vmem:[%s26] sm:$0x1] %v459
    %v461 = vld [vmem:[%s2] sm:$0x3]
    %vm462 = vcmask 15360
    %v464 = vsel %vm462, %v461, 0
    %v466 = vsel %vm227, %v152, 0
    %468 = vmatpush.msra.mxu0 0.0
    %469 = vmatpush.msra.mxu0 0.0
    %470 = vmatpush.msra.mxu0 0.0
    %471 = vmatpush.msra.mxu0 0.0
    %472 = vmatpush.msra.mxu0 0.0
    %473 = vmatpush.msra.mxu0 0.0
    %474 = vmatpush.msra.mxu0 0.0
    %475 = vmatpush.msra.mxu0 0.0
    %476 = vmatpush.msra.mxu0 0.0
    %477 = vmatpush.msra.mxu0 0.0
    %478 = vmatpush.msra.mxu0 0.0
    %479 = vmatpush.msra.mxu0 0.0
    %480 = vmatpush.msra.mxu0 0.0
    %481 = vmatpush.msra.mxu0 0.0
    %482 = vmatpush.msra.mxu0 0.0
    %483 = vmatpush.msra.mxu0 %v466
    %484 = vmatmul.f32.gmra.mxu0 %v464
    %v485 = vpop.f32.mrf.mxu0
    %v486 = vadd.f32 0.0, %v485
    %487 = vdwg.mxu0
    %v489 = vperm.slane %v255, 0
    %v492 = vsel %vm153, %v486, 0
    %v495 = vsel %vm86, %v249, 0
    %497 = vmatpush.msra.mxu0 0.0
    %498 = vmatpush.msra.mxu0 0.0
    %499 = vmatpush.msra.mxu0 0.0
    %500 = vmatpush.msra.mxu0 0.0
    %501 = vmatpush.msra.mxu0 0.0
    %502 = vmatpush.msra.mxu0 0.0
    %503 = vmatpush.msra.mxu0 0.0
    %504 = vmatpush.msra.mxu0 0.0
    %505 = vmatpush.msra.mxu0 0.0
    %506 = vmatpush.msra.mxu0 0.0
    %507 = vmatpush.msra.mxu0 0.0
    %508 = vmatpush.msra.mxu0 0.0
    %509 = vmatpush.msra.mxu0 0.0
    %510 = vmatpush.msra.mxu0 0.0
    %511 = vmatpush.msra.mxu0 0.0
    %512 = vmatpush.msra.mxu0 %v495
    %513 = vmatmul.f32.gmra.mxu0 %v492
    %v514 = vpop.f32.mrf.mxu0
    %v515 = vadd.f32 %v489, %v514
    %516 = vdwg.mxu0
    %v518 = vperm.slane %v357, 0
    %520 = vmatpush.msra.mxu0 %v336
    %521 = vmatpush.msra.mxu0 %v335
    %522 = vmatpush.msra.mxu0 %v334
    %523 = vmatpush.msra.mxu0 %v333
    %524 = vmatpush.msra.mxu0 %v332
    %525 = vmatpush.msra.mxu0 %v331
    %526 = vmatpush.msra.mxu0 %v330
    %527 = vmatpush.msra.mxu0 %v329
    %528 = vmatpush.msra.mxu0 %v328
    %529 = vmatpush.msra.mxu0 %v327
    %530 = vmatpush.msra.mxu0 %v326
    %531 = vmatpush.msra.mxu0 %v325
    %532 = vmatpush.msra.mxu0 %v324
    %533 = vmatpush.msra.mxu0 %v323
    %534 = vmatpush.msra.mxu0 %v322
    %535 = vmatpush.msra.mxu0 %v321
    %536 = vmatmul.f32.gmra.mxu0 %v515
    %v537 = vpop.f32.mrf.mxu0
    %v538 = vadd.f32 %v518, %v537
    %539 = vdwg.mxu0
    %v540 = vmax.f32 %v538, 0.0
    %v542 = vperm.slane %v459, 0
    %544 = vmatpush.msra.mxu0 %v438
    %545 = vmatpush.msra.mxu0 %v437
    %546 = vmatpush.msra.mxu0 %v436
    %547 = vmatpush.msra.mxu0 %v435
    %548 = vmatpush.msra.mxu0 %v434
    %549 = vmatpush.msra.mxu0 %v433
    %550 = vmatpush.msra.mxu0 %v432
    %551 = vmatpush.msra.mxu0 %v431
    %552 = vmatpush.msra.mxu0 %v430
    %553 = vmatpush.msra.mxu0 %v429
    %554 = vmatpush.msra.mxu0 %v428
    %555 = vmatpush.msra.mxu0 %v427
    %556 = vmatpush.msra.mxu0 %v426
    %557 = vmatpush.msra.mxu0 %v425
    %558 = vmatpush.msra.mxu0 %v424
    %559 = vmatpush.msra.mxu0 %v423
    %560 = vmatmul.f32.gmra.mxu0 %v540
    %v561 = vpop.f32.mrf.mxu0
    %v562 = vadd.f32 %v542, %v561
    %563 = vdwg.mxu0
    %v564 = vmul.f32 %v562, %v562
    %v565 = vsel %vm227, %v564, 0.0
    %566 = vadd.xlane.f32.xlu0 %v565
    %v567 = vpop.xlane.xlu0 %566
    %v568 = vmax.f32 %v567, 1e-24
    %v569 = vrsqrt.pop %v568
    %v570 = vmul.f32 %v569, %v568
    %v571 = vmul.f32 %v570, %v569
    %v572 = vmul.f32 0.5, %v571
    %v573 = vsub.f32 1.5, %v572
    %v574 = vmul.f32 %v569, %v573
    %vm575 = vweird.f32 %v568
    %vm576 = vweird.f32 %v569
    %vm577 = vmor %vm575, %vm576
    %v578 = vsel %vm577, %v569, %v574
    %v579 = vmul.f32 %v562, %v578
    %v580 = vld [vmem:[%s3] sm:$0x3]
    %v582 = vsel %vm462, %v580, 0
    %v585 = vsel %vm227, %v579, 0
    %587 = vmatpush.msra.mxu0 0.0
    %588 = vmatpush.msra.mxu0 0.0
    %589 = vmatpush.msra.mxu0 0.0
    %590 = vmatpush.msra.mxu0 0.0
    %591 = vmatpush.msra.mxu0 0.0
    %592 = vmatpush.msra.mxu0 0.0
    %593 = vmatpush.msra.mxu0 0.0
    %594 = vmatpush.msra.mxu0 0.0
    %595 = vmatpush.msra.mxu0 0.0
    %596 = vmatpush.msra.mxu0 0.0
    %597 = vmatpush.msra.mxu0 0.0
    %598 = vmatpush.msra.mxu0 0.0
    %599 = vmatpush.msra.mxu0 0.0
    %600 = vmatpush.msra.mxu0 0.0
    %601 = vmatpush.msra.mxu0 0.0
    %602 = vmatpush.msra.mxu0 %v585
    %603 = vmatmul.f32.gmra.mxu0 %v582
    %v604 = vpop.f32.mrf.mxu0
    %v605 = vadd.f32 0.0, %v604
    %606 = vdwg.mxu0
    %607 = vst [vmem:[#allocation7] sm:$0x3] %v605
    %v608 = vld [vmem:[%s16] sm:$0xff]
    %v609 = vld [vmem:[%s16 + $0x8] sm:$0xff]
    %v610 = vld [vmem:[%s16 + $0x10] sm:$0xff]
    %v611 = vld [vmem:[%s16 + $0x18] sm:$0xff]
    %v612 = vld [vmem:[%s16 + $0x20] sm:$0xff]
    %v613 = vld [vmem:[%s16 + $0x28] sm:$0xff]
    %v614 = vld [vmem:[%s16 + $0x30] sm:$0xff]
    %v615 = vld [vmem:[%s16 + $0x38] sm:$0xff]
    %v616 = vld [vmem:[%s16 + $0x40] sm:$0xff]
    %v617 = vld [vmem:[%s16 + $0x48] sm:$0xff]
    %v618 = vld [vmem:[%s16 + $0x50] sm:$0xff]
    %v619 = vld [vmem:[%s16 + $0x58] sm:$0xff]
    %v620 = vld [vmem:[%s16 + $0x60] sm:$0xff]
    %v621 = vld [vmem:[%s16 + $0x68] sm:$0xff]
    %v622 = vld [vmem:[%s16 + $0x70] sm:$0xff]
    %v623 = vld [vmem:[%s16 + $0x78] sm:$0xff]
    %v624 = vmul.f32 %v242, %v605
    %v625 = vsel %vm227, %v624, 0.0
    %626 = vadd.xlane.f32.xlu0 %v625
    %v627 = vpop.xlane.xlu0 %626
    %628 = vmatpush.xpose.msra.mxu0 %v623
    %629 = vmatpush.xpose.msra.mxu0 %v622
    %630 = vmatpush.xpose.msra.mxu0 %v621
    %631 = vmatpush.xpose.msra.mxu0 %v620
    %632 = vmatpush.xpose.msra.mxu0 %v619
    %633 = vmatpush.xpose.msra.mxu0 %v618
    %634 = vmatpush.xpose.msra.mxu0 %v617
    %635 = vmatpush.xpose.msra.mxu0 %v616
    %636 = vmatpush.xpose.msra.mxu0 %v615
    %637 = vmatpush.xpose.msra.mxu0 %v614
    %638 = vmatpush.xpose.msra.mxu0 %v613
    %639 = vmatpush.xpose.msra.mxu0 %v612
    %640 = vmatpush.xpose.msra.mxu0 %v611
    %641 = vmatpush.xpose.msra.mxu0 %v610
    %642 = vmatpush.xpose.msra.mxu0 %v609
    %643 = vmatpush.xpose.msra.mxu0 %v608
    %644 = vmatmul.f32.gmra.mxu0 %v242
    %v645 = vpop.f32.mrf.mxu0
    %v646 = vadd.f32 0.0, %v645
    %647 = vdwg.mxu0
    %649 = vrot.lane.b32.xlu0 %v646, 1
    %v650 = vpop.permute.xlu0 %649
    %vm652 = vcmask 7168
    %v653 = vsel %vm652, %v627, %v650
    %v654 = vsel %vm652, %v650, 0.0
    %v655 = vmul.f32 %v653, 14.285714
    %v656 = vmul.f32 %v654, 14.285714
    %v659 = vrot.slane %v656, 6
    %v660 = vsel %vm227, %v655, %v659
    %662 = vst [vmem:[#allocation8] sm:$0xf] %v660
    %s663 = sld [smem:[#allocation2]]
    %v664 = vlaneseq
    %v665 = vshrl.u32 %v664, 7
    %v666 = vadd.s32 %v665, 8
    %v667 = vadd.s32 %v665, 16
    %v668 = vadd.s32 %v665, 24
    %v669 = vadd.s32 %v665, 32
    %v670 = vadd.s32 %v665, 40
    %v671 = vadd.s32 %v665, 48
    %v672 = vadd.s32 %v665, 56
    %v673 = vadd.s32 %v665, 64
    %v674 = vadd.s32 %v665, 72
    %v675 = vadd.s32 %v665, 80
    %v676 = vadd.s32 %v665, 88
    %v677 = vadd.s32 %v665, 96
    %v678 = vadd.s32 %v665, 104
    %v679 = vadd.s32 %v665, 112
    %v680 = vadd.s32 %v665, 120
    %v681 = vstv %s663
    %v682 = vadd.s32 %v148, %v681
    %vm683 = vcmp.eq.s32.totalorder %v665, %v682
    %vm684 = vcmp.eq.s32.totalorder %v666, %v682
    %vm685 = vcmp.eq.s32.totalorder %v667, %v682
    %vm686 = vcmp.eq.s32.totalorder %v668, %v682
    %vm687 = vcmp.eq.s32.totalorder %v669, %v682
    %vm688 = vcmp.eq.s32.totalorder %v670, %v682
    %vm689 = vcmp.eq.s32.totalorder %v671, %v682
    %vm690 = vcmp.eq.s32.totalorder %v672, %v682
    %vm691 = vcmp.eq.s32.totalorder %v673, %v682
    %vm692 = vcmp.eq.s32.totalorder %v674, %v682
    %vm693 = vcmp.eq.s32.totalorder %v675, %v682
    %vm694 = vcmp.eq.s32.totalorder %v676, %v682
    %vm695 = vcmp.eq.s32.totalorder %v677, %v682
    %vm696 = vcmp.eq.s32.totalorder %v678, %v682
    %vm697 = vcmp.eq.s32.totalorder %v679, %v682
    %vm698 = vcmp.eq.s32.totalorder %v680, %v682
    %v699 = vsel %vm683, 1, 0
    %v700 = vsel %vm684, 1, 0
    %v701 = vsel %vm685, 1, 0
    %v702 = vsel %vm686, 1, 0
    %v703 = vsel %vm687, 1, 0
    %v704 = vsel %vm688, 1, 0
    %v705 = vsel %vm689, 1, 0
    %v706 = vsel %vm690, 1, 0
    %v707 = vsel %vm691, 1, 0
    %v708 = vsel %vm692, 1, 0
    %v709 = vsel %vm693, 1, 0
    %v710 = vsel %vm694, 1, 0
    %v711 = vsel %vm695, 1, 0
    %v712 = vsel %vm696, 1, 0
    %v713 = vsel %vm697, 1, 0
    %v714 = vsel %vm698, 1, 0
    %v715 = vcvt.s32.f32 %v699
    %v716 = vcvt.s32.f32 %v700
    %v717 = vcvt.s32.f32 %v701
    %v718 = vcvt.s32.f32 %v702
    %v719 = vcvt.s32.f32 %v703
    %v720 = vcvt.s32.f32 %v704
    %v721 = vcvt.s32.f32 %v705
    %v722 = vcvt.s32.f32 %v706
    %v723 = vcvt.s32.f32 %v707
    %v724 = vcvt.s32.f32 %v708
    %v725 = vcvt.s32.f32 %v709
    %v726 = vcvt.s32.f32 %v710
    %v727 = vcvt.s32.f32 %v711
    %v728 = vcvt.s32.f32 %v712
    %v729 = vcvt.s32.f32 %v713
    %v730 = vcvt.s32.f32 %v714
    %v732 = vsel %vm462, %v715, 0
    %v735 = vsel %vm462, %v716, 0
    %v738 = vsel %vm462, %v717, 0
    %v741 = vsel %vm462, %v718, 0
    %v744 = vsel %vm462, %v719, 0
    %v747 = vsel %vm462, %v720, 0
    %v750 = vsel %vm462, %v721, 0
    %v753 = vsel %vm462, %v722, 0
    %v756 = vsel %vm462, %v723, 0
    %v759 = vsel %vm462, %v724, 0
    %v762 = vsel %vm462, %v725, 0
    %v765 = vsel %vm462, %v726, 0
    %v768 = vsel %vm462, %v727, 0
    %v771 = vsel %vm462, %v728, 0
    %v774 = vsel %vm462, %v729, 0
    %v777 = vsel %vm462, %v730, 0
    %v780 = vsel %vm227, %v605, 0
    %782 = vmatpush.msra.mxu0 0.0
    %783 = vmatpush.msra.mxu0 0.0
    %784 = vmatpush.msra.mxu0 0.0
    %785 = vmatpush.msra.mxu0 0.0
    %786 = vmatpush.msra.mxu0 0.0
    %787 = vmatpush.msra.mxu0 0.0
    %788 = vmatpush.msra.mxu0 0.0
    %789 = vmatpush.msra.mxu0 0.0
    %790 = vmatpush.msra.mxu0 0.0
    %791 = vmatpush.msra.mxu0 0.0
    %792 = vmatpush.msra.mxu0 0.0
    %793 = vmatpush.msra.mxu0 0.0
    %794 = vmatpush.msra.mxu0 0.0
    %795 = vmatpush.msra.mxu0 0.0
    %796 = vmatpush.msra.mxu0 0.0
    %797 = vmatpush.msra.mxu0 %v780
    %798 = vmatmul.f32.gmra.mxu0 %v732
    %v799 = vpop.f32.mrf.mxu0
    %v800 = vadd.f32 0.0, %v799
    %801 = vmatmul.f32.gmra.mxu0 %v735
    %v802 = vpop.f32.mrf.mxu0
    %v803 = vadd.f32 0.0, %v802
    %804 = vmatmul.f32.gmra.mxu0 %v738
    %v805 = vpop.f32.mrf.mxu0
    %v806 = vadd.f32 0.0, %v805
    %807 = vmatmul.f32.gmra.mxu0 %v741
    %v808 = vpop.f32.mrf.mxu0
    %v809 = vadd.f32 0.0, %v808
    %810 = vmatmul.f32.gmra.mxu0 %v744
    %v811 = vpop.f32.mrf.mxu0
    %v812 = vadd.f32 0.0, %v811
    %813 = vmatmul.f32.gmra.mxu0 %v747
    %v814 = vpop.f32.mrf.mxu0
    %v815 = vadd.f32 0.0, %v814
    %816 = vmatmul.f32.gmra.mxu0 %v750
    %v817 = vpop.f32.mrf.mxu0
    %v818 = vadd.f32 0.0, %v817
    %819 = vmatmul.f32.gmra.mxu0 %v753
    %v820 = vpop.f32.mrf.mxu0
    %v821 = vadd.f32 0.0, %v820
    %822 = vmatmul.f32.gmra.mxu0 %v756
    %v823 = vpop.f32.mrf.mxu0
    %v824 = vadd.f32 0.0, %v823
    %825 = vmatmul.f32.gmra.mxu0 %v759
    %v826 = vpop.f32.mrf.mxu0
    %v827 = vadd.f32 0.0, %v826
    %828 = vmatmul.f32.gmra.mxu0 %v762
    %v829 = vpop.f32.mrf.mxu0
    %v830 = vadd.f32 0.0, %v829
    %831 = vmatmul.f32.gmra.mxu0 %v765
    %v832 = vpop.f32.mrf.mxu0
    %v833 = vadd.f32 0.0, %v832
    %834 = vmatmul.f32.gmra.mxu0 %v768
    %v835 = vpop.f32.mrf.mxu0
    %v836 = vadd.f32 0.0, %v835
    %837 = vmatmul.f32.gmra.mxu0 %v771
    %v838 = vpop.f32.mrf.mxu0
    %v839 = vadd.f32 0.0, %v838
    %840 = vmatmul.f32.gmra.mxu0 %v774
    %v841 = vpop.f32.mrf.mxu0
    %v842 = vadd.f32 0.0, %v841
    %843 = vmatmul.f32.gmra.mxu0 %v777
    %v844 = vpop.f32.mrf.mxu0
    %v845 = vadd.f32 0.0, %v844
    %846 = vdwg.mxu0
    %vm847 = vcmp.ge.s32.totalorder %v665, %v681
    %vm848 = vcmp.ge.s32.totalorder %v666, %v681
    %vm849 = vcmp.ge.s32.totalorder %v667, %v681
    %vm850 = vcmp.ge.s32.totalorder %v668, %v681
    %vm851 = vcmp.ge.s32.totalorder %v669, %v681
    %vm852 = vcmp.ge.s32.totalorder %v670, %v681
    %vm853 = vcmp.ge.s32.totalorder %v671, %v681
    %vm854 = vcmp.ge.s32.totalorder %v672, %v681
    %vm855 = vcmp.ge.s32.totalorder %v673, %v681
    %vm856 = vcmp.ge.s32.totalorder %v674, %v681
    %vm857 = vcmp.ge.s32.totalorder %v675, %v681
    %vm858 = vcmp.ge.s32.totalorder %v676, %v681
    %vm859 = vcmp.ge.s32.totalorder %v677, %v681
    %vm860 = vcmp.ge.s32.totalorder %v678, %v681
    %vm861 = vcmp.ge.s32.totalorder %v679, %v681
    %vm862 = vcmp.ge.s32.totalorder %v680, %v681
    %s863 = sadd.s32 %s663, 2
    %v864 = vstv %s863
    %vm865 = vcmp.lt.s32.totalorder %v665, %v864
    %vm866 = vcmp.lt.s32.totalorder %v666, %v864
    %vm867 = vcmp.lt.s32.totalorder %v667, %v864
    %vm868 = vcmp.lt.s32.totalorder %v668, %v864
    %vm869 = vcmp.lt.s32.totalorder %v669, %v864
    %vm870 = vcmp.lt.s32.totalorder %v670, %v864
    %vm871 = vcmp.lt.s32.totalorder %v671, %v864
    %vm872 = vcmp.lt.s32.totalorder %v672, %v864
    %vm873 = vcmp.lt.s32.totalorder %v673, %v864
    %vm874 = vcmp.lt.s32.totalorder %v674, %v864
    %vm875 = vcmp.lt.s32.totalorder %v675, %v864
    %vm876 = vcmp.lt.s32.totalorder %v676, %v864
    %vm877 = vcmp.lt.s32.totalorder %v677, %v864
    %vm878 = vcmp.lt.s32.totalorder %v678, %v864
    %vm879 = vcmp.lt.s32.totalorder %v679, %v864
    %vm880 = vcmp.lt.s32.totalorder %v680, %v864
    %vm881 = vmand %vm847, %vm865
    %vm882 = vmand %vm848, %vm866
    %vm883 = vmand %vm849, %vm867
    %vm884 = vmand %vm850, %vm868
    %vm885 = vmand %vm851, %vm869
    %vm886 = vmand %vm852, %vm870
    %vm887 = vmand %vm853, %vm871
    %vm888 = vmand %vm854, %vm872
    %vm889 = vmand %vm855, %vm873
    %vm890 = vmand %vm856, %vm874
    %vm891 = vmand %vm857, %vm875
    %vm892 = vmand %vm858, %vm876
    %vm893 = vmand %vm859, %vm877
    %vm894 = vmand %vm860, %vm878
    %vm895 = vmand %vm861, %vm879
    %vm896 = vmand %vm862, %vm880
    %v897 = vsel %vm881, %v800, %v608
    %v898 = vsel %vm882, %v803, %v609
    %v899 = vsel %vm883, %v806, %v610
    %v900 = vsel %vm884, %v809, %v611
    %v901 = vsel %vm885, %v812, %v612
    %v902 = vsel %vm886, %v815, %v613
    %v903 = vsel %vm887, %v818, %v614
    %v904 = vsel %vm888, %v821, %v615
    %v905 = vsel %vm889, %v824, %v616
    %v906 = vsel %vm890, %v827, %v617
    %v907 = vsel %vm891, %v830, %v618
    %v908 = vsel %vm892, %v833, %v619
    %v909 = vsel %vm893, %v836, %v620
    %v910 = vsel %vm894, %v839, %v621
    %v911 = vsel %vm895, %v842, %v622
    %v912 = vsel %vm896, %v845, %v623
    %913 = vst [vmem:[%s27] sm:$0xff] %v897
    %914 = vst [vmem:[%s27 + $0x8] sm:$0xff] %v898
    %915 = vst [vmem:[%s27 + $0x10] sm:$0xff] %v899
    %916 = vst [vmem:[%s27 + $0x18] sm:$0xff] %v900
    %917 = vst [vmem:[%s27 + $0x20] sm:$0xff] %v901
    %918 = vst [vmem:[%s27 + $0x28] sm:$0xff] %v902
    %919 = vst [vmem:[%s27 + $0x30] sm:$0xff] %v903
    %920 = vst [vmem:[%s27 + $0x38] sm:$0xff] %v904
    %921 = vst [vmem:[%s27 + $0x40] sm:$0xff] %v905
    %922 = vst [vmem:[%s27 + $0x48] sm:$0xff] %v906
    %923 = vst [vmem:[%s27 + $0x50] sm:$0xff] %v907
    %924 = vst [vmem:[%s27 + $0x58] sm:$0xff] %v908
    %925 = vst [vmem:[%s27 + $0x60] sm:$0xff] %v909
    %926 = vst [vmem:[%s27 + $0x68] sm:$0xff] %v910
    %927 = vst [vmem:[%s27 + $0x70] sm:$0xff] %v911
    %928 = vst [vmem:[%s27 + $0x78] sm:$0xff] %v912
    // Predicated region
    $region70: #{forward.1} parent=1 // pred_check
      _
    $region71: #{forward.1} parent=1 // pred_check_branch
      %930 = sbr.rel (0) target = $region73
    $region72: #{forward.1} parent=1 // pred_region
      %932 = vsyncadd [#allocation4], 0
      %s934 = sshll.u32 [#allocation3], 4
      %s935 = int_to_ptr.vmem [resolvable:$true] %s934
      %s936 = sshll.u32 %s17, 4
      %s937 = int_to_ptr.hbm [resolvable:$true] %s936
      %939 = dma.vmem_to_hbm [thread:$0]  %s935, 32, %s937, [#allocation4]
    $region73: #{forward.1} parent=1 // pred_fallthru
      _
    // Predicated region
    $region74: #{forward.1} parent=1 // pred_check
      _
    $region75: #{forward.1} parent=1 // pred_check_branch
      %941 = sbr.rel (0) target = $region77
    $region76: #{forward.1} parent=1 // pred_region
      %943 = vsyncadd [#allocation6], 0
      %s945 = sshll.u32 [#allocation5], 4
      %s946 = int_to_ptr.vmem [resolvable:$true] %s945
      %s947 = sshll.u32 %s18, 4
      %s948 = int_to_ptr.hbm [resolvable:$true] %s947
      %950 = dma.vmem_to_hbm [thread:$0]  %s946, 32, %s948, [#allocation6]
    $region77: #{forward.1} parent=1 // pred_fallthru
      _
    // Predicated region
    $region78: #{forward.1} parent=1 // pred_check
      _
    $region79: #{forward.1} parent=1 // pred_check_branch
      %952 = sbr.rel (0) target = $region81
    $region80: #{forward.1} parent=1 // pred_region
      %954 = vsyncadd [#allocation6], 0
      %s956 = sshll.u32 [#allocation7], 4
      %s957 = int_to_ptr.vmem [resolvable:$true] %s956
      %s958 = sshll.u32 %s19, 4
      %s959 = int_to_ptr.hbm [resolvable:$true] %s958
      %961 = dma.vmem_to_hbm [thread:$0]  %s957, 32, %s959, [#allocation6]
    $region81: #{forward.1} parent=1 // pred_fallthru
      _
    // Predicated region
    $region82: #{forward.1} parent=1 // pred_check
      _
    $region83: #{forward.1} parent=1 // pred_check_branch
      %963 = sbr.rel (0) target = $region85
    $region84: #{forward.1} parent=1 // pred_region
      %965 = vsyncadd [#allocation9], 0
      %s967 = sshll.u32 [#allocation8], 4
      %s968 = int_to_ptr.vmem [resolvable:$true] %s967
      %s969 = sshll.u32 %s20, 4
      %s970 = int_to_ptr.hbm [resolvable:$true] %s969
      %972 = dma.vmem_to_hbm [thread:$0]  %s968, 64, %s970, [#allocation9]
    $region85: #{forward.1} parent=1 // pred_fallthru
      _
    // Predicated region
    $region86: #{forward.1} parent=1 // pred_check
      _
    $region87: #{forward.1} parent=1 // pred_check_branch
      %974 = sbr.rel (0) target = $region89
    $region88: #{forward.1} parent=1 // pred_region
      _
    $region89: #{forward.1} parent=1 // pred_fallthru
      _
    // Predicated region
    $region90: #{forward.1} parent=1 // pred_check
      _
    $region91: #{forward.1} parent=1 // pred_check_branch
      %976 = sbr.rel (0) target = $region93
    $region92: #{forward.1} parent=1 // pred_region
      _
    $region93: #{forward.1} parent=1 // pred_fallthru
      _
    // Predicated region
    $region94: #{forward.1} parent=1 // pred_check
      _
    $region95: #{forward.1} parent=1 // pred_check_branch
      %978 = sbr.rel (0) target = $region97
    $region96: #{forward.1} parent=1 // pred_region
      _
    $region97: #{forward.1} parent=1 // pred_fallthru
      _
    // Predicated region
    $region98: #{forward.1} parent=1 // pred_check
      _
    $region99: #{forward.1} parent=1 // pred_check_branch
      %980 = sbr.rel (0) target = $region101
    $region100: #{forward.1} parent=1 // pred_region
      _
    $region101: #{forward.1} parent=1 // pred_fallthru
      _
    // Predicated region
    $region102: #{forward.1} parent=1 // pred_check
      _
    $region103: #{forward.1} parent=1 // pred_check_branch
      %982 = sbr.rel (0) target = $region105
    $region104: #{forward.1} parent=1 // pred_region
      _
    $region105: #{forward.1} parent=1 // pred_fallthru
      _
    // Predicated region
    $region106: #{forward.1} parent=1 // pred_check
      _
    $region107: #{forward.1} parent=1 // pred_check_branch
      %984 = sbr.rel (0) target = $region109
    $region108: #{forward.1} parent=1 // pred_region
      _
    $region109: #{forward.1} parent=1 // pred_fallthru
      _
    // Predicated region
    $region110: #{forward.1} parent=1 // pred_check
      _
    $region111: #{forward.1} parent=1 // pred_check_branch
      %986 = sbr.rel (0) target = $region113
    $region112: #{forward.1} parent=1 // pred_region
      _
    $region113: #{forward.1} parent=1 // pred_fallthru
      _
    // Predicated region
    $region114: #{forward.1} parent=1 // pred_check
      _
    $region115: #{forward.1} parent=1 // pred_check_branch
      %988 = sbr.rel (0) target = $region117
    $region116: #{forward.1} parent=1 // pred_region
      %990 = dma.done [#allocation4], 32
    $region117: #{forward.1} parent=1 // pred_fallthru
      _
    // Predicated region
    $region118: #{forward.1} parent=1 // pred_check
      _
    $region119: #{forward.1} parent=1 // pred_check_branch
      %992 = sbr.rel (0) target = $region121
    $region120: #{forward.1} parent=1 // pred_region
      %994 = dma.done [#allocation6], 32
    $region121: #{forward.1} parent=1 // pred_fallthru
      _
    // Predicated region
    $region122: #{forward.1} parent=1 // pred_check
      _
    $region123: #{forward.1} parent=1 // pred_check_branch
      %996 = sbr.rel (0) target = $region125
    $region124: #{forward.1} parent=1 // pred_region
      %998 = dma.done [#allocation6], 32
    $region125: #{forward.1} parent=1 // pred_fallthru
      _
    // Predicated region
    $region126: #{forward.1} parent=1 // pred_check
      _
    $region127: #{forward.1} parent=1 // pred_check_branch
      %1000 = sbr.rel (0) target = $region129
    $region128: #{forward.1} parent=1 // pred_region
      %1002 = dma.done [#allocation9], 64
    $region129: #{forward.1} parent=1 // pred_fallthru
      _
    // Predicated region
    $region130: #{forward.1} parent=1 // pred_check
      _
    $region131: #{forward.1} parent=1 // pred_check_branch
      %1004 = sbr.rel (0) target = $region133
    $region132: #{forward.1} parent=1 // pred_region
      _
    $region133: #{forward.1} parent=1 // pred_fallthru
      _
    // Predicated region
    $region134: #{forward.1} parent=1 // pred_check
      _
    $region135: #{forward.1} parent=1 // pred_check_branch
      %1006 = sbr.rel (0) target = $region137
    $region136: #{forward.1} parent=1 // pred_region
      _
    $region137: #{forward.1} parent=1 // pred_fallthru
      _
    // Predicated region
    $region138: #{forward.1} parent=1 // pred_check
      _
    $region139: #{forward.1} parent=1 // pred_check_branch
      %1008 = sbr.rel (0) target = $region141
    $region140: #{forward.1} parent=1 // pred_region
      _
    $region141: #{forward.1} parent=1 // pred_fallthru
      _
    // Predicated region
    $region142: #{forward.1} parent=1 // pred_check
      _
    $region143: #{forward.1} parent=1 // pred_check_branch
      %1010 = sbr.rel (0) target = $region145
    $region144: #{forward.1} parent=1 // pred_region
      _
    $region145: #{forward.1} parent=1 // pred_fallthru
      _
    // Predicated region
    $region146: #{forward.1} parent=1 // pred_check
      _
    $region147: #{forward.1} parent=1 // pred_check_branch
      %1012 = sbr.rel (0) target = $region149
    $region148: #{forward.1} parent=1 // pred_region
      _
    $region149: #{forward.1} parent=1 // pred_fallthru
      _
    // Predicated region
    $region150: #{forward.1} parent=1 // pred_check
      _
    $region151: #{forward.1} parent=1 // pred_check_branch
      %1014 = sbr.rel (0) target = $region153
    $region152: #{forward.1} parent=1 // pred_region
      _
    $region153: #{forward.1} parent=1 // pred_fallthru
      _
    // Predicated region
    $region154: #{forward.1} parent=1 // pred_check
      _
    $region155: #{forward.1} parent=1 // pred_check_branch
      %1016 = sbr.rel (0) target = $region157
    $region156: #{forward.1} parent=1 // pred_region
      _
    $region157: #{forward.1} parent=1 // pred_fallthru
      _
    %1017 = vsyncpa [#allocation4], 1
    %1018 = vsyncpa [#allocation6], 1
    %1019 = vsyncpa [#allocation9], 1

</llo_original>
